<compile_context>
chip_gen: v7x
topology: tpu7x:2x2x1
jax: 0.10.0
libtpu: 0.0.40
codegen_flags: <defaults>
</compile_context>

<pallas_src>
import functools

import jax
import jax.numpy as jnp
from jax.experimental import pallas as pl
from jax.experimental.pallas import tpu as pltpu


# Sequential-conv order inside the packed weight / bias arrays.
_AB, _ADAFM, _M2, _A2 = range(4)

# Tap offsets (oy, ox) = (dy - 1, dx - 1), tap index k = dy * 3 + dx.
_TAPS = tuple((dy - 1, dx - 1) for dy in range(3) for dx in range(3))


# ----------------------------------------------------------------------------
# Fused Pallas kernel
# ----------------------------------------------------------------------------
def _saab_kernel(x_ref, wseq_ref, bseq_ref, wbr_ref, bbr_ref, o_ref, stk_ref,
                 *, H, W, C):
    """Fully fused SAAB forward for one batch element.

    x_ref:    (1, C, H*W)   channel-major input, flattened spatial on lanes
    wseq_ref: (4, C, 9*C)   tap-flattened weights for AB, adafm, mul2, add2
    bseq_ref: (4, C, 1)     matching biases
    wbr_ref:  (2*C, 9*C)    [mul_conv1; add_conv1] stacked weights
    bbr_ref:  (2*C, 1)      matching biases
    o_ref:    (1, C, H*W)
    stk_ref:  (9*C, H*W)    VMEM scratch holding the current tap stack
    """
    HW = H * W
    x = x_ref[0]                                            # (C, HW) f32

    # --- per-tap border-validity masks (shared by all convs) ----------------
    # Lane p encodes (y, x) = (p // W, p % W).  y-conditions are written
    # directly on p; the x-condition uses p % W (bitwise-and when W is a
    # power of two).
    lane = jax.lax.broadcasted_iota(jnp.int32, (C, HW), 1)
    px = jnp.bitwise_and(lane, W - 1) if (W & (W - 1)) == 0 else lane % W

    masks = []
    for oy, ox in _TAPS:
        conds = []
        if oy < 0:
            conds.append(lane >= (-oy) * W)                 # y + oy >= 0
        if oy > 0:
            conds.append(lane < (H - oy) * W)               # y + oy <  H
        if ox < 0:
            conds.append(px >= -ox)                         # x + ox >= 0
        if ox > 0:
            conds.append(px < W - ox)                       # x + ox <  W
        m = None
        for c in conds:
            m = c if m is None else (m & c)
        masks.append(m)                                     # None for center tap

    def build_stack(t):
        """Write the 9 border-masked shifted copies of t into stk_ref and
        return the (9C, HW) stack value."""
        for k, (oy, ox) in enumerate(_TAPS):
            s = oy * W + ox
            if s == 0:
                part = t
            else:
                rolled = pltpu.roll(t, (-s) % HW, axis=1)   # rolled[p] = t[p + s]
                part = jnp.where(masks[k], rolled, 0.0)
            stk_ref[k * C:(k + 1) * C, :] = part            # sublane-aligned store
        return stk_ref[...]

    def conv(stack, idx):
        """One 3x3 'same' conv = single MXU dot on the tap stack."""
        return jnp.dot(wseq_ref[idx], stack,
                       preferred_element_type=jnp.float32) + bseq_ref[idx]

    leaky = lambda v: jnp.maximum(v, 0.2 * v)               # LeakyReLU(0.2)

    # x1 = adafm(relu(conv3_1_A(x) + conv3_1_B(x)))   (A/B merged into one 3x3)
    y0 = conv(build_stack(x), _AB)
    x1 = conv(build_stack(jnp.maximum(y0, 0.0)), _ADAFM)

    # mul / add branches share x1: one tap stack, one stacked (2C, 9C) dot.
    s1 = build_stack(x1)
    tm_ta = jnp.dot(wbr_ref[...], s1,
                    preferred_element_type=jnp.float32) + bbr_ref[...]
    tm = leaky(tm_ta[:C])                                   # mul branch pre-act
    ta = leaky(tm_ta[C:])                                   # add branch pre-act

    mul_pre = conv(build_stack(tm), _M2)
    add = conv(build_stack(ta), _A2)

    # Fused epilogue: m = x * sigmoid(mul) + add   (EUP approx reciprocal)
    sig = pl.reciprocal(1.0 + jnp.exp(-mul_pre), approx=True)
    o_ref[0] = x * sig + add


def saab_pallas(x_nchw, w_seq, b_seq, w_br, b_br):
    """x_nchw: (B, C, H, W) f32.
    w_seq: (4, C, 9C); b_seq: (4, C, 1); w_br: (2C, 9C); b_br: (2C, 1)."""
    B, C, H, W = x_nchw.shape
    HW = H * W
    x = x_nchw.reshape(B, C, HW)                            # no transpose needed
    kernel = functools.partial(_saab_kernel, H=H, W=W, C=C)
    out = pl.pallas_call(
        kernel,
        out_shape=jax.ShapeDtypeStruct((B, C, HW), jnp.float32),
        grid=(B,),
        in_specs=[
            pl.BlockSpec((1, C, HW), lambda b: (b, 0, 0)),
            pl.BlockSpec((4, C, 9 * C), lambda b: (0, 0, 0)),
            pl.BlockSpec((4, C, 1), lambda b: (0, 0, 0)),
            pl.BlockSpec((2 * C, 9 * C), lambda b: (0, 0)),
            pl.BlockSpec((2 * C, 1), lambda b: (0, 0)),
        ],
        out_specs=pl.BlockSpec((1, C, HW), lambda b: (b, 0, 0)),
        scratch_shapes=[pltpu.VMEM((9 * C, HW), jnp.float32)],
        compiler_params=pltpu.CompilerParams(
            dimension_semantics=("parallel",)),
    )(x, w_seq, b_seq, w_br, b_br)
    return out.reshape(B, C, H, W)


# ----------------------------------------------------------------------------
# Parameter setup (deterministic, synthetic) and packing
# ----------------------------------------------------------------------------
def _weight_norm(v, g):
    # torch weight_norm with dim=0: w = g * v / ||v|| over (Cin, kh, kw)
    nrm = jnp.sqrt(jnp.sum(v * v, axis=(1, 2, 3), keepdims=True))
    return g[:, None, None, None] * v / nrm


def _flatten_taps(w_oihw):
    # (Cout, Cin, 3, 3) -> (Cout, 9*Cin), column index = (dy*3 + dx)*Cin + cin
    co, ci = w_oihw.shape[:2]
    return jnp.transpose(w_oihw, (0, 2, 3, 1)).reshape(co, 9 * ci)


def init_params(key, C):
    ks = jax.random.split(key, 20)
    w = lambda k, shape: 0.1 * jax.random.normal(k, shape, jnp.float32)
    bias = lambda k: 0.05 * jax.random.normal(k, (C,), jnp.float32)
    g = lambda k: 0.3 + 0.2 * jax.random.uniform(k, (C,), jnp.float32)
    return {
        # weight-normalized convs
        "wA": _weight_norm(w(ks[0], (C, C, 3, 1)), g(ks[1])), "bA": bias(ks[2]),
        "wB": _weight_norm(w(ks[3], (C, C, 1, 3)), g(ks[4])), "bB": bias(ks[5]),
        "w_adafm": _weight_norm(w(ks[6], (C, C, 3, 3)), g(ks[7])),
        "b_adafm": bias(ks[8]),
        # plain convs
        "w_m1": w(ks[9], (C, C, 3, 3)), "b_m1": bias(ks[10]),
        "w_m2": w(ks[11], (C, C, 3, 3)), "b_m2": bias(ks[12]),
        "w_a1": w(ks[13], (C, C, 3, 3)), "b_a1": bias(ks[14]),
        "w_a2": w(ks[15], (C, C, 3, 3)), "b_a2": bias(ks[16]),
    }


def pack_params(P, C):
    # Merge the (3,1) and (1,3) convs into one 3x3 pad-1 conv (exact).
    wA3 = jnp.zeros((C, C, 3, 3), jnp.float32).at[:, :, :, 1].set(P["wA"][:, :, :, 0])
    wB3 = jnp.zeros((C, C, 3, 3), jnp.float32).at[:, :, 1, :].set(P["wB"][:, :, 0, :])
    seq_w = [wA3 + wB3, P["w_adafm"], P["w_m2"], P["w_a2"]]
    seq_b = [P["bA"] + P["bB"], P["b_adafm"], P["b_m2"], P["b_a2"]]
    w_seq = jnp.stack([_flatten_taps(wi) for wi in seq_w])          # (4, C, 9C)
    b_seq = jnp.stack([bi.reshape(C, 1) for bi in seq_b])           # (4, C, 1)
    # mul_conv1 / add_conv1 share their input (x1) -> stack into one dot.
    w_br = jnp.concatenate(
        [_flatten_taps(P["w_m1"]), _flatten_taps(P["w_a1"])], axis=0)  # (2C, 9C)
    b_br = jnp.concatenate([P["b_m1"], P["b_a1"]]).reshape(2 * C, 1)   # (2C, 1)
    return w_seq, b_seq, w_br, b_br


# ----------------------------------------------------------------------------
# Pure-JAX reference (mirrors the PyTorch forward exactly, in NCHW)
# ----------------------------------------------------------------------------
def saab_reference(x, P):
    def conv(v, wt, b, ph, pw):
        out = jax.lax.conv_general_dilated(
            v, wt, window_strides=(1, 1), padding=((ph, ph), (pw, pw)),
            dimension_numbers=("NCHW", "OIHW", "NCHW"))
        return out + b[None, :, None, None]
    lrelu = lambda v: jnp.where(v > 0, v, 0.2 * v)
    x1 = conv(x, P["wA"], P["bA"], 1, 0) + conv(x, P["wB"], P["bB"], 0, 1)
    x1 = jnp.maximum(x1, 0.0)
    x1 = conv(x1, P["w_adafm"], P["b_adafm"], 1, 1)
    mul = jax.nn.sigmoid(
        conv(lrelu(conv(x1, P["w_m1"], P["b_m1"], 1, 1)), P["w_m2"], P["b_m2"], 1, 1))
    add = conv(lrelu(conv(x1, P["w_a1"], P["b_a1"], 1, 1)), P["w_a2"], P["b_a2"], 1, 1)
    return x * mul + add


if __name__ == "__main__":
    B, C, H, W = 2, 8, 16, 16          # n_feats = 8
    key = jax.random.PRNGKey(0)
    kx, kp = jax.random.split(key)
    x = jax.random.normal(kx, (B, C, H, W), jnp.float32)
    params = init_params(kp, C)
    packed = pack_params(params, C)

    fwd = jax.jit(saab_pallas)
    out = jax.block_until_ready(fwd(x, *packed))

    ref = saab_reference(x, params)
    assert out.shape == (B, C, H, W)
    max_err = float(jnp.max(jnp.abs(out - ref)))
    assert max_err < 1e-2, f"mismatch vs reference: max abs err {max_err}"
    print("KERNEL_OK")
</pallas_src>

<mosaic_0001>
module attributes {stable_mosaic.version = 11 : i64} {
  func.func @_saab_kernel(%arg0: i32, %arg1: memref<1x8x256xf32, #tpu.memory_space<vmem>>, %arg2: memref<4x8x72xf32, #tpu.memory_space<vmem>>, %arg3: memref<4x8x1xf32, #tpu.memory_space<vmem>>, %arg4: memref<16x72xf32, #tpu.memory_space<vmem>>, %arg5: memref<16x1xf32, #tpu.memory_space<vmem>>, %arg6: memref<1x8x256xf32, #tpu.memory_space<vmem>>, %arg7: memref<72x256xf32, #tpu.memory_space<vmem>>) attributes {dimension_semantics = [#tpu.dimension_semantics<parallel>], iteration_bounds = array<i64: 2>, scalar_prefetch = 0 : i64, scratch_operands = 1 : i64, tpu.core_type = #tpu.core_type<tc>, window_params = [{transform_indices = @transform_0, window_bounds = array<i64: 1, 8, 256>}, {pipeline_mode = #tpu.pipeline_mode<synchronous>, transform_indices = @transform_1, window_bounds = array<i64: 4, 8, 72>}, {pipeline_mode = #tpu.pipeline_mode<synchronous>, transform_indices = @transform_2, window_bounds = array<i64: 4, 8, 1>}, {pipeline_mode = #tpu.pipeline_mode<synchronous>, transform_indices = @transform_3, window_bounds = array<i64: 16, 72>}, {pipeline_mode = #tpu.pipeline_mode<synchronous>, transform_indices = @transform_4, window_bounds = array<i64: 16, 1>}, {transform_indices = @transform_5, window_bounds = array<i64: 1, 8, 256>}]} {
    %c0 = arith.constant 0 : index
    %c0_0 = arith.constant 0 : index
    %c0_1 = arith.constant 0 : index
    %0 = vector.load %arg1[%c0, %c0_0, %c0_1] : memref<1x8x256xf32, #tpu.memory_space<vmem>>, vector<1x8x256xf32>
    %1 = vector.shape_cast %0 : vector<1x8x256xf32> to vector<8x256xf32>
    %2 = tpu.iota {dimensions = array<i32: 1>} : vector<8x256xi32>
    %c15_i32 = arith.constant 15 : i32
    %3 = vector.broadcast %c15_i32 : i32 to vector<8x256xi32>
    %4 = arith.andi %2, %3 : vector<8x256xi32>
    %c16_i32 = arith.constant 16 : i32
    %5 = vector.broadcast %c16_i32 : i32 to vector<8x256xi32>
    %6 = arith.cmpi sge, %2, %5 : vector<8x256xi32>
    %c1_i32 = arith.constant 1 : i32
    %7 = vector.broadcast %c1_i32 : i32 to vector<8x256xi32>
    %8 = arith.cmpi sge, %4, %7 : vector<8x256xi32>
    %9 = arith.andi %6, %8 : vector<8x256xi1>
    %c16_i32_2 = arith.constant 16 : i32
    %10 = vector.broadcast %c16_i32_2 : i32 to vector<8x256xi32>
    %11 = arith.cmpi sge, %2, %10 : vector<8x256xi32>
    %c16_i32_3 = arith.constant 16 : i32
    %12 = vector.broadcast %c16_i32_3 : i32 to vector<8x256xi32>
    %13 = arith.cmpi sge, %2, %12 : vector<8x256xi32>
    %c15_i32_4 = arith.constant 15 : i32
    %14 = vector.broadcast %c15_i32_4 : i32 to vector<8x256xi32>
    %15 = arith.cmpi slt, %4, %14 : vector<8x256xi32>
    %16 = arith.andi %13, %15 : vector<8x256xi1>
    %c1_i32_5 = arith.constant 1 : i32
    %17 = vector.broadcast %c1_i32_5 : i32 to vector<8x256xi32>
    %18 = arith.cmpi sge, %4, %17 : vector<8x256xi32>
    %c15_i32_6 = arith.constant 15 : i32
    %19 = vector.broadcast %c15_i32_6 : i32 to vector<8x256xi32>
    %20 = arith.cmpi slt, %4, %19 : vector<8x256xi32>
    %c240_i32 = arith.constant 240 : i32
    %21 = vector.broadcast %c240_i32 : i32 to vector<8x256xi32>
    %22 = arith.cmpi slt, %2, %21 : vector<8x256xi32>
    %c1_i32_7 = arith.constant 1 : i32
    %23 = vector.broadcast %c1_i32_7 : i32 to vector<8x256xi32>
    %24 = arith.cmpi sge, %4, %23 : vector<8x256xi32>
    %25 = arith.andi %22, %24 : vector<8x256xi1>
    %c240_i32_8 = arith.constant 240 : i32
    %26 = vector.broadcast %c240_i32_8 : i32 to vector<8x256xi32>
    %27 = arith.cmpi slt, %2, %26 : vector<8x256xi32>
    %c240_i32_9 = arith.constant 240 : i32
    %28 = vector.broadcast %c240_i32_9 : i32 to vector<8x256xi32>
    %29 = arith.cmpi slt, %2, %28 : vector<8x256xi32>
    %c15_i32_10 = arith.constant 15 : i32
    %30 = vector.broadcast %c15_i32_10 : i32 to vector<8x256xi32>
    %31 = arith.cmpi slt, %4, %30 : vector<8x256xi32>
    %32 = arith.andi %29, %31 : vector<8x256xi1>
    %c17_i32 = arith.constant 17 : i32
    %33 = tpu.dynamic_rotate %1 by %c17_i32 dim 1 : vector<8x256xf32>, i32 -> vector<8x256xf32>
    %cst = arith.constant 0.000000e+00 : f32
    %34 = vector.broadcast %cst : f32 to vector<8x256xf32>
    %35 = arith.select %9, %33, %34 : vector<8x256xi1>, vector<8x256xf32>
    %c0_11 = arith.constant 0 : index
    %c0_12 = arith.constant 0 : index
    %36 = vector.load %arg7[%c0_11, %c0_12] : memref<72x256xf32, #tpu.memory_space<vmem>>, vector<8x256xf32>
    tpu.vector_store %arg7[%c0_11, %c0_12], %35 {strides = array<i32>} : memref<72x256xf32, #tpu.memory_space<vmem>>, vector<8x256xf32>,
    %c16_i32_13 = arith.constant 16 : i32
    %37 = tpu.dynamic_rotate %1 by %c16_i32_13 dim 1 : vector<8x256xf32>, i32 -> vector<8x256xf32>
    %cst_14 = arith.constant 0.000000e+00 : f32
    %38 = vector.broadcast %cst_14 : f32 to vector<8x256xf32>
    %39 = arith.select %11, %37, %38 : vector<8x256xi1>, vector<8x256xf32>
    %c8 = arith.constant 8 : index
    %c0_15 = arith.constant 0 : index
    %40 = vector.load %arg7[%c8, %c0_15] : memref<72x256xf32, #tpu.memory_space<vmem>>, vector<8x256xf32>
    tpu.vector_store %arg7[%c8, %c0_15], %39 {strides = array<i32>} : memref<72x256xf32, #tpu.memory_space<vmem>>, vector<8x256xf32>,
    %c15_i32_16 = arith.constant 15 : i32
    %41 = tpu.dynamic_rotate %1 by %c15_i32_16 dim 1 : vector<8x256xf32>, i32 -> vector<8x256xf32>
    %cst_17 = arith.constant 0.000000e+00 : f32
    %42 = vector.broadcast %cst_17 : f32 to vector<8x256xf32>
    %43 = arith.select %16, %41, %42 : vector<8x256xi1>, vector<8x256xf32>
    %c16 = arith.constant 16 : index
    %c0_18 = arith.constant 0 : index
    %44 = vector.load %arg7[%c16, %c0_18] : memref<72x256xf32, #tpu.memory_space<vmem>>, vector<8x256xf32>
    tpu.vector_store %arg7[%c16, %c0_18], %43 {strides = array<i32>} : memref<72x256xf32, #tpu.memory_space<vmem>>, vector<8x256xf32>,
    %c1_i32_19 = arith.constant 1 : i32
    %45 = tpu.dynamic_rotate %1 by %c1_i32_19 dim 1 : vector<8x256xf32>, i32 -> vector<8x256xf32>
    %cst_20 = arith.constant 0.000000e+00 : f32
    %46 = vector.broadcast %cst_20 : f32 to vector<8x256xf32>
    %47 = arith.select %18, %45, %46 : vector<8x256xi1>, vector<8x256xf32>
    %c24 = arith.constant 24 : index
    %c0_21 = arith.constant 0 : index
    %48 = vector.load %arg7[%c24, %c0_21] : memref<72x256xf32, #tpu.memory_space<vmem>>, vector<8x256xf32>
    tpu.vector_store %arg7[%c24, %c0_21], %47 {strides = array<i32>} : memref<72x256xf32, #tpu.memory_space<vmem>>, vector<8x256xf32>,
    %c32 = arith.constant 32 : index
    %c0_22 = arith.constant 0 : index
    %49 = vector.load %arg7[%c32, %c0_22] : memref<72x256xf32, #tpu.memory_space<vmem>>, vector<8x256xf32>
    tpu.vector_store %arg7[%c32, %c0_22], %1 {strides = array<i32>} : memref<72x256xf32, #tpu.memory_space<vmem>>, vector<8x256xf32>,
    %c255_i32 = arith.constant 255 : i32
    %50 = tpu.dynamic_rotate %1 by %c255_i32 dim 1 : vector<8x256xf32>, i32 -> vector<8x256xf32>
    %cst_23 = arith.constant 0.000000e+00 : f32
    %51 = vector.broadcast %cst_23 : f32 to vector<8x256xf32>
    %52 = arith.select %20, %50, %51 : vector<8x256xi1>, vector<8x256xf32>
    %c40 = arith.constant 40 : index
    %c0_24 = arith.constant 0 : index
    %53 = vector.load %arg7[%c40, %c0_24] : memref<72x256xf32, #tpu.memory_space<vmem>>, vector<8x256xf32>
    tpu.vector_store %arg7[%c40, %c0_24], %52 {strides = array<i32>} : memref<72x256xf32, #tpu.memory_space<vmem>>, vector<8x256xf32>,
    %c241_i32 = arith.constant 241 : i32
    %54 = tpu.dynamic_rotate %1 by %c241_i32 dim 1 : vector<8x256xf32>, i32 -> vector<8x256xf32>
    %cst_25 = arith.constant 0.000000e+00 : f32
    %55 = vector.broadcast %cst_25 : f32 to vector<8x256xf32>
    %56 = arith.select %25, %54, %55 : vector<8x256xi1>, vector<8x256xf32>
    %c48 = arith.constant 48 : index
    %c0_26 = arith.constant 0 : index
    %57 = vector.load %arg7[%c48, %c0_26] : memref<72x256xf32, #tpu.memory_space<vmem>>, vector<8x256xf32>
    tpu.vector_store %arg7[%c48, %c0_26], %56 {strides = array<i32>} : memref<72x256xf32, #tpu.memory_space<vmem>>, vector<8x256xf32>,
    %c240_i32_27 = arith.constant 240 : i32
    %58 = tpu.dynamic_rotate %1 by %c240_i32_27 dim 1 : vector<8x256xf32>, i32 -> vector<8x256xf32>
    %cst_28 = arith.constant 0.000000e+00 : f32
    %59 = vector.broadcast %cst_28 : f32 to vector<8x256xf32>
    %60 = arith.select %27, %58, %59 : vector<8x256xi1>, vector<8x256xf32>
    %c56 = arith.constant 56 : index
    %c0_29 = arith.constant 0 : index
    %61 = vector.load %arg7[%c56, %c0_29] : memref<72x256xf32, #tpu.memory_space<vmem>>, vector<8x256xf32>
    tpu.vector_store %arg7[%c56, %c0_29], %60 {strides = array<i32>} : memref<72x256xf32, #tpu.memory_space<vmem>>, vector<8x256xf32>,
    %c239_i32 = arith.constant 239 : i32
    %62 = tpu.dynamic_rotate %1 by %c239_i32 dim 1 : vector<8x256xf32>, i32 -> vector<8x256xf32>
    %cst_30 = arith.constant 0.000000e+00 : f32
    %63 = vector.broadcast %cst_30 : f32 to vector<8x256xf32>
    %64 = arith.select %32, %62, %63 : vector<8x256xi1>, vector<8x256xf32>
    %c64 = arith.constant 64 : index
    %c0_31 = arith.constant 0 : index
    %65 = vector.load %arg7[%c64, %c0_31] : memref<72x256xf32, #tpu.memory_space<vmem>>, vector<8x256xf32>
    tpu.vector_store %arg7[%c64, %c0_31], %64 {strides = array<i32>} : memref<72x256xf32, #tpu.memory_space<vmem>>, vector<8x256xf32>,
    %c0_32 = arith.constant 0 : index
    %c0_33 = arith.constant 0 : index
    %66 = vector.load %arg7[%c0_32, %c0_33] : memref<72x256xf32, #tpu.memory_space<vmem>>, vector<72x256xf32>
    %c0_34 = arith.constant 0 : index
    %c0_35 = arith.constant 0 : index
    %c0_36 = arith.constant 0 : index
    %67 = vector.load %arg2[%c0_34, %c0_35, %c0_36] : memref<4x8x72xf32, #tpu.memory_space<vmem>>, vector<1x8x72xf32>
    %68 = vector.shape_cast %67 : vector<1x8x72xf32> to vector<8x72xf32>
    %cst_37 = arith.constant dense<0.000000e+00> : vector<8x256xf32>
    %69 = tpu.matmul %68, %66, %cst_37 {dimension_numbers = #tpu.dot_dimension_numbers<[1], [0], [0], [1], [0, 0, 1, 1], [], []>} : vector<8x72xf32>, vector<72x256xf32>, vector<8x256xf32> -> vector<8x256xf32>
    %c0_38 = arith.constant 0 : index
    %c0_39 = arith.constant 0 : index
    %c0_40 = arith.constant 0 : index
    %70 = vector.load %arg3[%c0_38, %c0_39, %c0_40] : memref<4x8x1xf32, #tpu.memory_space<vmem>>, vector<1x8x1xf32>
    %71 = vector.shape_cast %70 : vector<1x8x1xf32> to vector<8x1xf32>
    %72 = vector.broadcast %71 : vector<8x1xf32> to vector<8x256xf32>
    %73 = arith.addf %69, %72 : vector<8x256xf32>
    %cst_41 = arith.constant 0.000000e+00 : f32
    %74 = vector.broadcast %cst_41 : f32 to vector<8x256xf32>
    %75 = arith.maximumf %73, %74 : vector<8x256xf32>
    %c17_i32_42 = arith.constant 17 : i32
    %76 = tpu.dynamic_rotate %75 by %c17_i32_42 dim 1 : vector<8x256xf32>, i32 -> vector<8x256xf32>
    %cst_43 = arith.constant 0.000000e+00 : f32
    %77 = vector.broadcast %cst_43 : f32 to vector<8x256xf32>
    %78 = arith.select %9, %76, %77 : vector<8x256xi1>, vector<8x256xf32>
    %c0_44 = arith.constant 0 : index
    %c0_45 = arith.constant 0 : index
    %79 = vector.load %arg7[%c0_44, %c0_45] : memref<72x256xf32, #tpu.memory_space<vmem>>, vector<8x256xf32>
    tpu.vector_store %arg7[%c0_44, %c0_45], %78 {strides = array<i32>} : memref<72x256xf32, #tpu.memory_space<vmem>>, vector<8x256xf32>,
    %c16_i32_46 = arith.constant 16 : i32
    %80 = tpu.dynamic_rotate %75 by %c16_i32_46 dim 1 : vector<8x256xf32>, i32 -> vector<8x256xf32>
    %cst_47 = arith.constant 0.000000e+00 : f32
    %81 = vector.broadcast %cst_47 : f32 to vector<8x256xf32>
    %82 = arith.select %11, %80, %81 : vector<8x256xi1>, vector<8x256xf32>
    %c8_48 = arith.constant 8 : index
    %c0_49 = arith.constant 0 : index
    %83 = vector.load %arg7[%c8_48, %c0_49] : memref<72x256xf32, #tpu.memory_space<vmem>>, vector<8x256xf32>
    tpu.vector_store %arg7[%c8_48, %c0_49], %82 {strides = array<i32>} : memref<72x256xf32, #tpu.memory_space<vmem>>, vector<8x256xf32>,
    %c15_i32_50 = arith.constant 15 : i32
    %84 = tpu.dynamic_rotate %75 by %c15_i32_50 dim 1 : vector<8x256xf32>, i32 -> vector<8x256xf32>
    %cst_51 = arith.constant 0.000000e+00 : f32
    %85 = vector.broadcast %cst_51 : f32 to vector<8x256xf32>
    %86 = arith.select %16, %84, %85 : vector<8x256xi1>, vector<8x256xf32>
    %c16_52 = arith.constant 16 : index
    %c0_53 = arith.constant 0 : index
    %87 = vector.load %arg7[%c16_52, %c0_53] : memref<72x256xf32, #tpu.memory_space<vmem>>, vector<8x256xf32>
    tpu.vector_store %arg7[%c16_52, %c0_53], %86 {strides = array<i32>} : memref<72x256xf32, #tpu.memory_space<vmem>>, vector<8x256xf32>,
    %c1_i32_54 = arith.constant 1 : i32
    %88 = tpu.dynamic_rotate %75 by %c1_i32_54 dim 1 : vector<8x256xf32>, i32 -> vector<8x256xf32>
    %cst_55 = arith.constant 0.000000e+00 : f32
    %89 = vector.broadcast %cst_55 : f32 to vector<8x256xf32>
    %90 = arith.select %18, %88, %89 : vector<8x256xi1>, vector<8x256xf32>
    %c24_56 = arith.constant 24 : index
    %c0_57 = arith.constant 0 : index
    %91 = vector.load %arg7[%c24_56, %c0_57] : memref<72x256xf32, #tpu.memory_space<vmem>>, vector<8x256xf32>
    tpu.vector_store %arg7[%c24_56, %c0_57], %90 {strides = array<i32>} : memref<72x256xf32, #tpu.memory_space<vmem>>, vector<8x256xf32>,
    %c32_58 = arith.constant 32 : index
    %c0_59 = arith.constant 0 : index
    %92 = vector.load %arg7[%c32_58, %c0_59] : memref<72x256xf32, #tpu.memory_space<vmem>>, vector<8x256xf32>
    tpu.vector_store %arg7[%c32_58, %c0_59], %75 {strides = array<i32>} : memref<72x256xf32, #tpu.memory_space<vmem>>, vector<8x256xf32>,
    %c255_i32_60 = arith.constant 255 : i32
    %93 = tpu.dynamic_rotate %75 by %c255_i32_60 dim 1 : vector<8x256xf32>, i32 -> vector<8x256xf32>
    %cst_61 = arith.constant 0.000000e+00 : f32
    %94 = vector.broadcast %cst_61 : f32 to vector<8x256xf32>
    %95 = arith.select %20, %93, %94 : vector<8x256xi1>, vector<8x256xf32>
    %c40_62 = arith.constant 40 : index
    %c0_63 = arith.constant 0 : index
    %96 = vector.load %arg7[%c40_62, %c0_63] : memref<72x256xf32, #tpu.memory_space<vmem>>, vector<8x256xf32>
    tpu.vector_store %arg7[%c40_62, %c0_63], %95 {strides = array<i32>} : memref<72x256xf32, #tpu.memory_space<vmem>>, vector<8x256xf32>,
    %c241_i32_64 = arith.constant 241 : i32
    %97 = tpu.dynamic_rotate %75 by %c241_i32_64 dim 1 : vector<8x256xf32>, i32 -> vector<8x256xf32>
    %cst_65 = arith.constant 0.000000e+00 : f32
    %98 = vector.broadcast %cst_65 : f32 to vector<8x256xf32>
    %99 = arith.select %25, %97, %98 : vector<8x256xi1>, vector<8x256xf32>
    %c48_66 = arith.constant 48 : index
    %c0_67 = arith.constant 0 : index
    %100 = vector.load %arg7[%c48_66, %c0_67] : memref<72x256xf32, #tpu.memory_space<vmem>>, vector<8x256xf32>
    tpu.vector_store %arg7[%c48_66, %c0_67], %99 {strides = array<i32>} : memref<72x256xf32, #tpu.memory_space<vmem>>, vector<8x256xf32>,
    %c240_i32_68 = arith.constant 240 : i32
    %101 = tpu.dynamic_rotate %75 by %c240_i32_68 dim 1 : vector<8x256xf32>, i32 -> vector<8x256xf32>
    %cst_69 = arith.constant 0.000000e+00 : f32
    %102 = vector.broadcast %cst_69 : f32 to vector<8x256xf32>
    %103 = arith.select %27, %101, %102 : vector<8x256xi1>, vector<8x256xf32>
    %c56_70 = arith.constant 56 : index
    %c0_71 = arith.constant 0 : index
    %104 = vector.load %arg7[%c56_70, %c0_71] : memref<72x256xf32, #tpu.memory_space<vmem>>, vector<8x256xf32>
    tpu.vector_store %arg7[%c56_70, %c0_71], %103 {strides = array<i32>} : memref<72x256xf32, #tpu.memory_space<vmem>>, vector<8x256xf32>,
    %c239_i32_72 = arith.constant 239 : i32
    %105 = tpu.dynamic_rotate %75 by %c239_i32_72 dim 1 : vector<8x256xf32>, i32 -> vector<8x256xf32>
    %cst_73 = arith.constant 0.000000e+00 : f32
    %106 = vector.broadcast %cst_73 : f32 to vector<8x256xf32>
    %107 = arith.select %32, %105, %106 : vector<8x256xi1>, vector<8x256xf32>
    %c64_74 = arith.constant 64 : index
    %c0_75 = arith.constant 0 : index
    %108 = vector.load %arg7[%c64_74, %c0_75] : memref<72x256xf32, #tpu.memory_space<vmem>>, vector<8x256xf32>
    tpu.vector_store %arg7[%c64_74, %c0_75], %107 {strides = array<i32>} : memref<72x256xf32, #tpu.memory_space<vmem>>, vector<8x256xf32>,
    %c0_76 = arith.constant 0 : index
    %c0_77 = arith.constant 0 : index
    %109 = vector.load %arg7[%c0_76, %c0_77] : memref<72x256xf32, #tpu.memory_space<vmem>>, vector<72x256xf32>
    %c1 = arith.constant 1 : index
    %c0_78 = arith.constant 0 : index
    %c0_79 = arith.constant 0 : index
    %110 = vector.load %arg2[%c1, %c0_78, %c0_79] : memref<4x8x72xf32, #tpu.memory_space<vmem>>, vector<1x8x72xf32>
    %111 = vector.shape_cast %110 : vector<1x8x72xf32> to vector<8x72xf32>
    %cst_80 = arith.constant dense<0.000000e+00> : vector<8x256xf32>
    %112 = tpu.matmul %111, %109, %cst_80 {dimension_numbers = #tpu.dot_dimension_numbers<[1], [0], [0], [1], [0, 0, 1, 1], [], []>} : vector<8x72xf32>, vector<72x256xf32>, vector<8x256xf32> -> vector<8x256xf32>
    %c1_81 = arith.constant 1 : index
    %c0_82 = arith.constant 0 : index
    %c0_83 = arith.constant 0 : index
    %113 = vector.load %arg3[%c1_81, %c0_82, %c0_83] : memref<4x8x1xf32, #tpu.memory_space<vmem>>, vector<1x8x1xf32>
    %114 = vector.shape_cast %113 : vector<1x8x1xf32> to vector<8x1xf32>
    %115 = vector.broadcast %114 : vector<8x1xf32> to vector<8x256xf32>
    %116 = arith.addf %112, %115 : vector<8x256xf32>
    %c17_i32_84 = arith.constant 17 : i32
    %117 = tpu.dynamic_rotate %116 by %c17_i32_84 dim 1 : vector<8x256xf32>, i32 -> vector<8x256xf32>
    %cst_85 = arith.constant 0.000000e+00 : f32
    %118 = vector.broadcast %cst_85 : f32 to vector<8x256xf32>
    %119 = arith.select %9, %117, %118 : vector<8x256xi1>, vector<8x256xf32>
    %c0_86 = arith.constant 0 : index
    %c0_87 = arith.constant 0 : index
    %120 = vector.load %arg7[%c0_86, %c0_87] : memref<72x256xf32, #tpu.memory_space<vmem>>, vector<8x256xf32>
    tpu.vector_store %arg7[%c0_86, %c0_87], %119 {strides = array<i32>} : memref<72x256xf32, #tpu.memory_space<vmem>>, vector<8x256xf32>,
    %c16_i32_88 = arith.constant 16 : i32
    %121 = tpu.dynamic_rotate %116 by %c16_i32_88 dim 1 : vector<8x256xf32>, i32 -> vector<8x256xf32>
    %cst_89 = arith.constant 0.000000e+00 : f32
    %122 = vector.broadcast %cst_89 : f32 to vector<8x256xf32>
    %123 = arith.select %11, %121, %122 : vector<8x256xi1>, vector<8x256xf32>
    %c8_90 = arith.constant 8 : index
    %c0_91 = arith.constant 0 : index
    %124 = vector.load %arg7[%c8_90, %c0_91] : memref<72x256xf32, #tpu.memory_space<vmem>>, vector<8x256xf32>
    tpu.vector_store %arg7[%c8_90, %c0_91], %123 {strides = array<i32>} : memref<72x256xf32, #tpu.memory_space<vmem>>, vector<8x256xf32>,
    %c15_i32_92 = arith.constant 15 : i32
    %125 = tpu.dynamic_rotate %116 by %c15_i32_92 dim 1 : vector<8x256xf32>, i32 -> vector<8x256xf32>
    %cst_93 = arith.constant 0.000000e+00 : f32
    %126 = vector.broadcast %cst_93 : f32 to vector<8x256xf32>
    %127 = arith.select %16, %125, %126 : vector<8x256xi1>, vector<8x256xf32>
    %c16_94 = arith.constant 16 : index
    %c0_95 = arith.constant 0 : index
    %128 = vector.load %arg7[%c16_94, %c0_95] : memref<72x256xf32, #tpu.memory_space<vmem>>, vector<8x256xf32>
    tpu.vector_store %arg7[%c16_94, %c0_95], %127 {strides = array<i32>} : memref<72x256xf32, #tpu.memory_space<vmem>>, vector<8x256xf32>,
    %c1_i32_96 = arith.constant 1 : i32
    %129 = tpu.dynamic_rotate %116 by %c1_i32_96 dim 1 : vector<8x256xf32>, i32 -> vector<8x256xf32>
    %cst_97 = arith.constant 0.000000e+00 : f32
    %130 = vector.broadcast %cst_97 : f32 to vector<8x256xf32>
    %131 = arith.select %18, %129, %130 : vector<8x256xi1>, vector<8x256xf32>
    %c24_98 = arith.constant 24 : index
    %c0_99 = arith.constant 0 : index
    %132 = vector.load %arg7[%c24_98, %c0_99] : memref<72x256xf32, #tpu.memory_space<vmem>>, vector<8x256xf32>
    tpu.vector_store %arg7[%c24_98, %c0_99], %131 {strides = array<i32>} : memref<72x256xf32, #tpu.memory_space<vmem>>, vector<8x256xf32>,
    %c32_100 = arith.constant 32 : index
    %c0_101 = arith.constant 0 : index
    %133 = vector.load %arg7[%c32_100, %c0_101] : memref<72x256xf32, #tpu.memory_space<vmem>>, vector<8x256xf32>
    tpu.vector_store %arg7[%c32_100, %c0_101], %116 {strides = array<i32>} : memref<72x256xf32, #tpu.memory_space<vmem>>, vector<8x256xf32>,
    %c255_i32_102 = arith.constant 255 : i32
    %134 = tpu.dynamic_rotate %116 by %c255_i32_102 dim 1 : vector<8x256xf32>, i32 -> vector<8x256xf32>
    %cst_103 = arith.constant 0.000000e+00 : f32
    %135 = vector.broadcast %cst_103 : f32 to vector<8x256xf32>
    %136 = arith.select %20, %134, %135 : vector<8x256xi1>, vector<8x256xf32>
    %c40_104 = arith.constant 40 : index
    %c0_105 = arith.constant 0 : index
    %137 = vector.load %arg7[%c40_104, %c0_105] : memref<72x256xf32, #tpu.memory_space<vmem>>, vector<8x256xf32>
    tpu.vector_store %arg7[%c40_104, %c0_105], %136 {strides = array<i32>} : memref<72x256xf32, #tpu.memory_space<vmem>>, vector<8x256xf32>,
    %c241_i32_106 = arith.constant 241 : i32
    %138 = tpu.dynamic_rotate %116 by %c241_i32_106 dim 1 : vector<8x256xf32>, i32 -> vector<8x256xf32>
    %cst_107 = arith.constant 0.000000e+00 : f32
    %139 = vector.broadcast %cst_107 : f32 to vector<8x256xf32>
    %140 = arith.select %25, %138, %139 : vector<8x256xi1>, vector<8x256xf32>
    %c48_108 = arith.constant 48 : index
    %c0_109 = arith.constant 0 : index
    %141 = vector.load %arg7[%c48_108, %c0_109] : memref<72x256xf32, #tpu.memory_space<vmem>>, vector<8x256xf32>
    tpu.vector_store %arg7[%c48_108, %c0_109], %140 {strides = array<i32>} : memref<72x256xf32, #tpu.memory_space<vmem>>, vector<8x256xf32>,
    %c240_i32_110 = arith.constant 240 : i32
    %142 = tpu.dynamic_rotate %116 by %c240_i32_110 dim 1 : vector<8x256xf32>, i32 -> vector<8x256xf32>
    %cst_111 = arith.constant 0.000000e+00 : f32
    %143 = vector.broadcast %cst_111 : f32 to vector<8x256xf32>
    %144 = arith.select %27, %142, %143 : vector<8x256xi1>, vector<8x256xf32>
    %c56_112 = arith.constant 56 : index
    %c0_113 = arith.constant 0 : index
    %145 = vector.load %arg7[%c56_112, %c0_113] : memref<72x256xf32, #tpu.memory_space<vmem>>, vector<8x256xf32>
    tpu.vector_store %arg7[%c56_112, %c0_113], %144 {strides = array<i32>} : memref<72x256xf32, #tpu.memory_space<vmem>>, vector<8x256xf32>,
    %c239_i32_114 = arith.constant 239 : i32
    %146 = tpu.dynamic_rotate %116 by %c239_i32_114 dim 1 : vector<8x256xf32>, i32 -> vector<8x256xf32>
    %cst_115 = arith.constant 0.000000e+00 : f32
    %147 = vector.broadcast %cst_115 : f32 to vector<8x256xf32>
    %148 = arith.select %32, %146, %147 : vector<8x256xi1>, vector<8x256xf32>
    %c64_116 = arith.constant 64 : index
    %c0_117 = arith.constant 0 : index
    %149 = vector.load %arg7[%c64_116, %c0_117] : memref<72x256xf32, #tpu.memory_space<vmem>>, vector<8x256xf32>
    tpu.vector_store %arg7[%c64_116, %c0_117], %148 {strides = array<i32>} : memref<72x256xf32, #tpu.memory_space<vmem>>, vector<8x256xf32>,
    %c0_118 = arith.constant 0 : index
    %c0_119 = arith.constant 0 : index
    %150 = vector.load %arg7[%c0_118, %c0_119] : memref<72x256xf32, #tpu.memory_space<vmem>>, vector<72x256xf32>
    %c0_120 = arith.constant 0 : index
    %c0_121 = arith.constant 0 : index
    %151 = vector.load %arg4[%c0_120, %c0_121] : memref<16x72xf32, #tpu.memory_space<vmem>>, vector<16x72xf32>
    %cst_122 = arith.constant dense<0.000000e+00> : vector<16x256xf32>
    %152 = tpu.matmul %151, %150, %cst_122 {dimension_numbers = #tpu.dot_dimension_numbers<[1], [0], [0], [1], [0, 0, 1, 1], [], []>} : vector<16x72xf32>, vector<72x256xf32>, vector<16x256xf32> -> vector<16x256xf32>
    %c0_123 = arith.constant 0 : index
    %c0_124 = arith.constant 0 : index
    %153 = vector.load %arg5[%c0_123, %c0_124] : memref<16x1xf32, #tpu.memory_space<vmem>>, vector<16x1xf32>
    %154 = vector.broadcast %153 : vector<16x1xf32> to vector<16x256xf32>
    %155 = arith.addf %152, %154 : vector<16x256xf32>
    %156 = vector.extract_strided_slice %155 {offsets = [0, 0], sizes = [8, 256], strides = [1, 1]} : vector<16x256xf32> to vector<8x256xf32>
    %cst_125 = arith.constant 2.000000e-01 : f32
    %157 = vector.broadcast %cst_125 : f32 to vector<8x256xf32>
    %158 = arith.mulf %157, %156 : vector<8x256xf32>
    %159 = arith.maximumf %156, %158 : vector<8x256xf32>
    %160 = vector.extract_strided_slice %155 {offsets = [8, 0], sizes = [8, 256], strides = [1, 1]} : vector<16x256xf32> to vector<8x256xf32>
    %cst_126 = arith.constant 2.000000e-01 : f32
    %161 = vector.broadcast %cst_126 : f32 to vector<8x256xf32>
    %162 = arith.mulf %161, %160 : vector<8x256xf32>
    %163 = arith.maximumf %160, %162 : vector<8x256xf32>
    %c17_i32_127 = arith.constant 17 : i32
    %164 = tpu.dynamic_rotate %159 by %c17_i32_127 dim 1 : vector<8x256xf32>, i32 -> vector<8x256xf32>
    %cst_128 = arith.constant 0.000000e+00 : f32
    %165 = vector.broadcast %cst_128 : f32 to vector<8x256xf32>
    %166 = arith.select %9, %164, %165 : vector<8x256xi1>, vector<8x256xf32>
    %c0_129 = arith.constant 0 : index
    %c0_130 = arith.constant 0 : index
    %167 = vector.load %arg7[%c0_129, %c0_130] : memref<72x256xf32, #tpu.memory_space<vmem>>, vector<8x256xf32>
    tpu.vector_store %arg7[%c0_129, %c0_130], %166 {strides = array<i32>} : memref<72x256xf32, #tpu.memory_space<vmem>>, vector<8x256xf32>,
    %c16_i32_131 = arith.constant 16 : i32
    %168 = tpu.dynamic_rotate %159 by %c16_i32_131 dim 1 : vector<8x256xf32>, i32 -> vector<8x256xf32>
    %cst_132 = arith.constant 0.000000e+00 : f32
    %169 = vector.broadcast %cst_132 : f32 to vector<8x256xf32>
    %170 = arith.select %11, %168, %169 : vector<8x256xi1>, vector<8x256xf32>
    %c8_133 = arith.constant 8 : index
    %c0_134 = arith.constant 0 : index
    %171 = vector.load %arg7[%c8_133, %c0_134] : memref<72x256xf32, #tpu.memory_space<vmem>>, vector<8x256xf32>
    tpu.vector_store %arg7[%c8_133, %c0_134], %170 {strides = array<i32>} : memref<72x256xf32, #tpu.memory_space<vmem>>, vector<8x256xf32>,
    %c15_i32_135 = arith.constant 15 : i32
    %172 = tpu.dynamic_rotate %159 by %c15_i32_135 dim 1 : vector<8x256xf32>, i32 -> vector<8x256xf32>
    %cst_136 = arith.constant 0.000000e+00 : f32
    %173 = vector.broadcast %cst_136 : f32 to vector<8x256xf32>
    %174 = arith.select %16, %172, %173 : vector<8x256xi1>, vector<8x256xf32>
    %c16_137 = arith.constant 16 : index
    %c0_138 = arith.constant 0 : index
    %175 = vector.load %arg7[%c16_137, %c0_138] : memref<72x256xf32, #tpu.memory_space<vmem>>, vector<8x256xf32>
    tpu.vector_store %arg7[%c16_137, %c0_138], %174 {strides = array<i32>} : memref<72x256xf32, #tpu.memory_space<vmem>>, vector<8x256xf32>,
    %c1_i32_139 = arith.constant 1 : i32
    %176 = tpu.dynamic_rotate %159 by %c1_i32_139 dim 1 : vector<8x256xf32>, i32 -> vector<8x256xf32>
    %cst_140 = arith.constant 0.000000e+00 : f32
    %177 = vector.broadcast %cst_140 : f32 to vector<8x256xf32>
    %178 = arith.select %18, %176, %177 : vector<8x256xi1>, vector<8x256xf32>
    %c24_141 = arith.constant 24 : index
    %c0_142 = arith.constant 0 : index
    %179 = vector.load %arg7[%c24_141, %c0_142] : memref<72x256xf32, #tpu.memory_space<vmem>>, vector<8x256xf32>
    tpu.vector_store %arg7[%c24_141, %c0_142], %178 {strides = array<i32>} : memref<72x256xf32, #tpu.memory_space<vmem>>, vector<8x256xf32>,
    %c32_143 = arith.constant 32 : index
    %c0_144 = arith.constant 0 : index
    %180 = vector.load %arg7[%c32_143, %c0_144] : memref<72x256xf32, #tpu.memory_space<vmem>>, vector<8x256xf32>
    tpu.vector_store %arg7[%c32_143, %c0_144], %159 {strides = array<i32>} : memref<72x256xf32, #tpu.memory_space<vmem>>, vector<8x256xf32>,
    %c255_i32_145 = arith.constant 255 : i32
    %181 = tpu.dynamic_rotate %159 by %c255_i32_145 dim 1 : vector<8x256xf32>, i32 -> vector<8x256xf32>
    %cst_146 = arith.constant 0.000000e+00 : f32
    %182 = vector.broadcast %cst_146 : f32 to vector<8x256xf32>
    %183 = arith.select %20, %181, %182 : vector<8x256xi1>, vector<8x256xf32>
    %c40_147 = arith.constant 40 : index
    %c0_148 = arith.constant 0 : index
    %184 = vector.load %arg7[%c40_147, %c0_148] : memref<72x256xf32, #tpu.memory_space<vmem>>, vector<8x256xf32>
    tpu.vector_store %arg7[%c40_147, %c0_148], %183 {strides = array<i32>} : memref<72x256xf32, #tpu.memory_space<vmem>>, vector<8x256xf32>,
    %c241_i32_149 = arith.constant 241 : i32
    %185 = tpu.dynamic_rotate %159 by %c241_i32_149 dim 1 : vector<8x256xf32>, i32 -> vector<8x256xf32>
    %cst_150 = arith.constant 0.000000e+00 : f32
    %186 = vector.broadcast %cst_150 : f32 to vector<8x256xf32>
    %187 = arith.select %25, %185, %186 : vector<8x256xi1>, vector<8x256xf32>
    %c48_151 = arith.constant 48 : index
    %c0_152 = arith.constant 0 : index
    %188 = vector.load %arg7[%c48_151, %c0_152] : memref<72x256xf32, #tpu.memory_space<vmem>>, vector<8x256xf32>
    tpu.vector_store %arg7[%c48_151, %c0_152], %187 {strides = array<i32>} : memref<72x256xf32, #tpu.memory_space<vmem>>, vector<8x256xf32>,
    %c240_i32_153 = arith.constant 240 : i32
    %189 = tpu.dynamic_rotate %159 by %c240_i32_153 dim 1 : vector<8x256xf32>, i32 -> vector<8x256xf32>
    %cst_154 = arith.constant 0.000000e+00 : f32
    %190 = vector.broadcast %cst_154 : f32 to vector<8x256xf32>
    %191 = arith.select %27, %189, %190 : vector<8x256xi1>, vector<8x256xf32>
    %c56_155 = arith.constant 56 : index
    %c0_156 = arith.constant 0 : index
    %192 = vector.load %arg7[%c56_155, %c0_156] : memref<72x256xf32, #tpu.memory_space<vmem>>, vector<8x256xf32>
    tpu.vector_store %arg7[%c56_155, %c0_156], %191 {strides = array<i32>} : memref<72x256xf32, #tpu.memory_space<vmem>>, vector<8x256xf32>,
    %c239_i32_157 = arith.constant 239 : i32
    %193 = tpu.dynamic_rotate %159 by %c239_i32_157 dim 1 : vector<8x256xf32>, i32 -> vector<8x256xf32>
    %cst_158 = arith.constant 0.000000e+00 : f32
    %194 = vector.broadcast %cst_158 : f32 to vector<8x256xf32>
    %195 = arith.select %32, %193, %194 : vector<8x256xi1>, vector<8x256xf32>
    %c64_159 = arith.constant 64 : index
    %c0_160 = arith.constant 0 : index
    %196 = vector.load %arg7[%c64_159, %c0_160] : memref<72x256xf32, #tpu.memory_space<vmem>>, vector<8x256xf32>
    tpu.vector_store %arg7[%c64_159, %c0_160], %195 {strides = array<i32>} : memref<72x256xf32, #tpu.memory_space<vmem>>, vector<8x256xf32>,
    %c0_161 = arith.constant 0 : index
    %c0_162 = arith.constant 0 : index
    %197 = vector.load %arg7[%c0_161, %c0_162] : memref<72x256xf32, #tpu.memory_space<vmem>>, vector<72x256xf32>
    %c2 = arith.constant 2 : index
    %c0_163 = arith.constant 0 : index
    %c0_164 = arith.constant 0 : index
    %198 = vector.load %arg2[%c2, %c0_163, %c0_164] : memref<4x8x72xf32, #tpu.memory_space<vmem>>, vector<1x8x72xf32>
    %199 = vector.shape_cast %198 : vector<1x8x72xf32> to vector<8x72xf32>
    %cst_165 = arith.constant dense<0.000000e+00> : vector<8x256xf32>
    %200 = tpu.matmul %199, %197, %cst_165 {dimension_numbers = #tpu.dot_dimension_numbers<[1], [0], [0], [1], [0, 0, 1, 1], [], []>} : vector<8x72xf32>, vector<72x256xf32>, vector<8x256xf32> -> vector<8x256xf32>
    %c2_166 = arith.constant 2 : index
    %c0_167 = arith.constant 0 : index
    %c0_168 = arith.constant 0 : index
    %201 = vector.load %arg3[%c2_166, %c0_167, %c0_168] : memref<4x8x1xf32, #tpu.memory_space<vmem>>, vector<1x8x1xf32>
    %202 = vector.shape_cast %201 : vector<1x8x1xf32> to vector<8x1xf32>
    %203 = vector.broadcast %202 : vector<8x1xf32> to vector<8x256xf32>
    %204 = arith.addf %200, %203 : vector<8x256xf32>
    %c17_i32_169 = arith.constant 17 : i32
    %205 = tpu.dynamic_rotate %163 by %c17_i32_169 dim 1 : vector<8x256xf32>, i32 -> vector<8x256xf32>
    %cst_170 = arith.constant 0.000000e+00 : f32
    %206 = vector.broadcast %cst_170 : f32 to vector<8x256xf32>
    %207 = arith.select %9, %205, %206 : vector<8x256xi1>, vector<8x256xf32>
    %c0_171 = arith.constant 0 : index
    %c0_172 = arith.constant 0 : index
    %208 = vector.load %arg7[%c0_171, %c0_172] : memref<72x256xf32, #tpu.memory_space<vmem>>, vector<8x256xf32>
    tpu.vector_store %arg7[%c0_171, %c0_172], %207 {strides = array<i32>} : memref<72x256xf32, #tpu.memory_space<vmem>>, vector<8x256xf32>,
    %c16_i32_173 = arith.constant 16 : i32
    %209 = tpu.dynamic_rotate %163 by %c16_i32_173 dim 1 : vector<8x256xf32>, i32 -> vector<8x256xf32>
    %cst_174 = arith.constant 0.000000e+00 : f32
    %210 = vector.broadcast %cst_174 : f32 to vector<8x256xf32>
    %211 = arith.select %11, %209, %210 : vector<8x256xi1>, vector<8x256xf32>
    %c8_175 = arith.constant 8 : index
    %c0_176 = arith.constant 0 : index
    %212 = vector.load %arg7[%c8_175, %c0_176] : memref<72x256xf32, #tpu.memory_space<vmem>>, vector<8x256xf32>
    tpu.vector_store %arg7[%c8_175, %c0_176], %211 {strides = array<i32>} : memref<72x256xf32, #tpu.memory_space<vmem>>, vector<8x256xf32>,
    %c15_i32_177 = arith.constant 15 : i32
    %213 = tpu.dynamic_rotate %163 by %c15_i32_177 dim 1 : vector<8x256xf32>, i32 -> vector<8x256xf32>
    %cst_178 = arith.constant 0.000000e+00 : f32
    %214 = vector.broadcast %cst_178 : f32 to vector<8x256xf32>
    %215 = arith.select %16, %213, %214 : vector<8x256xi1>, vector<8x256xf32>
    %c16_179 = arith.constant 16 : index
    %c0_180 = arith.constant 0 : index
    %216 = vector.load %arg7[%c16_179, %c0_180] : memref<72x256xf32, #tpu.memory_space<vmem>>, vector<8x256xf32>
    tpu.vector_store %arg7[%c16_179, %c0_180], %215 {strides = array<i32>} : memref<72x256xf32, #tpu.memory_space<vmem>>, vector<8x256xf32>,
    %c1_i32_181 = arith.constant 1 : i32
    %217 = tpu.dynamic_rotate %163 by %c1_i32_181 dim 1 : vector<8x256xf32>, i32 -> vector<8x256xf32>
    %cst_182 = arith.constant 0.000000e+00 : f32
    %218 = vector.broadcast %cst_182 : f32 to vector<8x256xf32>
    %219 = arith.select %18, %217, %218 : vector<8x256xi1>, vector<8x256xf32>
    %c24_183 = arith.constant 24 : index
    %c0_184 = arith.constant 0 : index
    %220 = vector.load %arg7[%c24_183, %c0_184] : memref<72x256xf32, #tpu.memory_space<vmem>>, vector<8x256xf32>
    tpu.vector_store %arg7[%c24_183, %c0_184], %219 {strides = array<i32>} : memref<72x256xf32, #tpu.memory_space<vmem>>, vector<8x256xf32>,
    %c32_185 = arith.constant 32 : index
    %c0_186 = arith.constant 0 : index
    %221 = vector.load %arg7[%c32_185, %c0_186] : memref<72x256xf32, #tpu.memory_space<vmem>>, vector<8x256xf32>
    tpu.vector_store %arg7[%c32_185, %c0_186], %163 {strides = array<i32>} : memref<72x256xf32, #tpu.memory_space<vmem>>, vector<8x256xf32>,
    %c255_i32_187 = arith.constant 255 : i32
    %222 = tpu.dynamic_rotate %163 by %c255_i32_187 dim 1 : vector<8x256xf32>, i32 -> vector<8x256xf32>
    %cst_188 = arith.constant 0.000000e+00 : f32
    %223 = vector.broadcast %cst_188 : f32 to vector<8x256xf32>
    %224 = arith.select %20, %222, %223 : vector<8x256xi1>, vector<8x256xf32>
    %c40_189 = arith.constant 40 : index
    %c0_190 = arith.constant 0 : index
    %225 = vector.load %arg7[%c40_189, %c0_190] : memref<72x256xf32, #tpu.memory_space<vmem>>, vector<8x256xf32>
    tpu.vector_store %arg7[%c40_189, %c0_190], %224 {strides = array<i32>} : memref<72x256xf32, #tpu.memory_space<vmem>>, vector<8x256xf32>,
    %c241_i32_191 = arith.constant 241 : i32
    %226 = tpu.dynamic_rotate %163 by %c241_i32_191 dim 1 : vector<8x256xf32>, i32 -> vector<8x256xf32>
    %cst_192 = arith.constant 0.000000e+00 : f32
    %227 = vector.broadcast %cst_192 : f32 to vector<8x256xf32>
    %228 = arith.select %25, %226, %227 : vector<8x256xi1>, vector<8x256xf32>
    %c48_193 = arith.constant 48 : index
    %c0_194 = arith.constant 0 : index
    %229 = vector.load %arg7[%c48_193, %c0_194] : memref<72x256xf32, #tpu.memory_space<vmem>>, vector<8x256xf32>
    tpu.vector_store %arg7[%c48_193, %c0_194], %228 {strides = array<i32>} : memref<72x256xf32, #tpu.memory_space<vmem>>, vector<8x256xf32>,
    %c240_i32_195 = arith.constant 240 : i32
    %230 = tpu.dynamic_rotate %163 by %c240_i32_195 dim 1 : vector<8x256xf32>, i32 -> vector<8x256xf32>
    %cst_196 = arith.constant 0.000000e+00 : f32
    %231 = vector.broadcast %cst_196 : f32 to vector<8x256xf32>
    %232 = arith.select %27, %230, %231 : vector<8x256xi1>, vector<8x256xf32>
    %c56_197 = arith.constant 56 : index
    %c0_198 = arith.constant 0 : index
    %233 = vector.load %arg7[%c56_197, %c0_198] : memref<72x256xf32, #tpu.memory_space<vmem>>, vector<8x256xf32>
    tpu.vector_store %arg7[%c56_197, %c0_198], %232 {strides = array<i32>} : memref<72x256xf32, #tpu.memory_space<vmem>>, vector<8x256xf32>,
    %c239_i32_199 = arith.constant 239 : i32
    %234 = tpu.dynamic_rotate %163 by %c239_i32_199 dim 1 : vector<8x256xf32>, i32 -> vector<8x256xf32>
    %cst_200 = arith.constant 0.000000e+00 : f32
    %235 = vector.broadcast %cst_200 : f32 to vector<8x256xf32>
    %236 = arith.select %32, %234, %235 : vector<8x256xi1>, vector<8x256xf32>
    %c64_201 = arith.constant 64 : index
    %c0_202 = arith.constant 0 : index
    %237 = vector.load %arg7[%c64_201, %c0_202] : memref<72x256xf32, #tpu.memory_space<vmem>>, vector<8x256xf32>
    tpu.vector_store %arg7[%c64_201, %c0_202], %236 {strides = array<i32>} : memref<72x256xf32, #tpu.memory_space<vmem>>, vector<8x256xf32>,
    %c0_203 = arith.constant 0 : index
    %c0_204 = arith.constant 0 : index
    %238 = vector.load %arg7[%c0_203, %c0_204] : memref<72x256xf32, #tpu.memory_space<vmem>>, vector<72x256xf32>
    %c3 = arith.constant 3 : index
    %c0_205 = arith.constant 0 : index
    %c0_206 = arith.constant 0 : index
    %239 = vector.load %arg2[%c3, %c0_205, %c0_206] : memref<4x8x72xf32, #tpu.memory_space<vmem>>, vector<1x8x72xf32>
    %240 = vector.shape_cast %239 : vector<1x8x72xf32> to vector<8x72xf32>
    %cst_207 = arith.constant dense<0.000000e+00> : vector<8x256xf32>
    %241 = tpu.matmul %240, %238, %cst_207 {dimension_numbers = #tpu.dot_dimension_numbers<[1], [0], [0], [1], [0, 0, 1, 1], [], []>} : vector<8x72xf32>, vector<72x256xf32>, vector<8x256xf32> -> vector<8x256xf32>
    %c3_208 = arith.constant 3 : index
    %c0_209 = arith.constant 0 : index
    %c0_210 = arith.constant 0 : index
    %242 = vector.load %arg3[%c3_208, %c0_209, %c0_210] : memref<4x8x1xf32, #tpu.memory_space<vmem>>, vector<1x8x1xf32>
    %243 = vector.shape_cast %242 : vector<1x8x1xf32> to vector<8x1xf32>
    %244 = vector.broadcast %243 : vector<8x1xf32> to vector<8x256xf32>
    %245 = arith.addf %241, %244 : vector<8x256xf32>
    %cst_211 = arith.constant 0.000000e+00 : f32
    %246 = vector.broadcast %cst_211 : f32 to vector<8x256xf32>
    %247 = arith.subf %246, %204 : vector<8x256xf32>
    %248 = math.exp %247 : vector<8x256xf32>
    %cst_212 = arith.constant 1.000000e+00 : f32
    %249 = vector.broadcast %cst_212 : f32 to vector<8x256xf32>
    %250 = arith.addf %249, %248 : vector<8x256xf32>
    %251 = tpu.reciprocal %250 {approx = true} : vector<8x256xf32> -> vector<8x256xf32>
    %252 = arith.mulf %1, %251 : vector<8x256xf32>
    %253 = arith.addf %252, %245 : vector<8x256xf32>
    %c0_213 = arith.constant 0 : index
    %c0_214 = arith.constant 0 : index
    %c0_215 = arith.constant 0 : index
    %254 = vector.load %arg6[%c0_213, %c0_214, %c0_215] : memref<1x8x256xf32, #tpu.memory_space<vmem>>, vector<1x8x256xf32>
    %255 = vector.shape_cast %254 : vector<1x8x256xf32> to vector<8x256xf32>
    %256 = vector.shape_cast %253 : vector<8x256xf32> to vector<1x8x256xf32>
    tpu.vector_store %arg6[%c0_213, %c0_214, %c0_215], %256 {strides = array<i32>} : memref<1x8x256xf32, #tpu.memory_space<vmem>>, vector<1x8x256xf32>,
    return
  }
  func.func @transform_0(%arg0: i32) -> (i32, i32, i32) {
    %c0_i32 = arith.constant 0 : i32
    %c0_i32_0 = arith.constant 0 : i32
    %c0_i32_1 = arith.constant 0 : i32
    return %arg0, %c0_i32, %c0_i32_0 : i32, i32, i32
  }
  func.func @transform_1(%arg0: i32) -> (i32, i32, i32) {
    %c0_i32 = arith.constant 0 : i32
    %c0_i32_0 = arith.constant 0 : i32
    %c0_i32_1 = arith.constant 0 : i32
    %c0_i32_2 = arith.constant 0 : i32
    return %c0_i32, %c0_i32_0, %c0_i32_1 : i32, i32, i32
  }
  func.func @transform_2(%arg0: i32) -> (i32, i32, i32) {
    %c0_i32 = arith.constant 0 : i32
    %c0_i32_0 = arith.constant 0 : i32
    %c0_i32_1 = arith.constant 0 : i32
    %c0_i32_2 = arith.constant 0 : i32
    return %c0_i32, %c0_i32_0, %c0_i32_1 : i32, i32, i32
  }
  func.func @transform_3(%arg0: i32) -> (i32, i32) {
    %c0_i32 = arith.constant 0 : i32
    %c0_i32_0 = arith.constant 0 : i32
    %c0_i32_1 = arith.constant 0 : i32
    return %c0_i32, %c0_i32_0 : i32, i32
  }
  func.func @transform_4(%arg0: i32) -> (i32, i32) {
    %c0_i32 = arith.constant 0 : i32
    %c0_i32_0 = arith.constant 0 : i32
    %c0_i32_1 = arith.constant 0 : i32
    return %c0_i32, %c0_i32_0 : i32, i32
  }
  func.func @transform_5(%arg0: i32) -> (i32, i32, i32) {
    %c0_i32 = arith.constant 0 : i32
    %c0_i32_0 = arith.constant 0 : i32
    %c0_i32_1 = arith.constant 0 : i32
    return %arg0, %c0_i32, %c0_i32_0 : i32, i32, i32
  }
}

</mosaic_0001>

<llo_original>
// kernel: saab_pallas.1
$region0: #{saab_pallas.1}
  #allocation0 [shape = 'u32[]', space=smem, size = 0x4, offset = 0x4, fixed_abs, tag = 'smem constant byte address 0x4 - core index']
  #allocation1 [shape = 'u32[144,128]{1,0:T(1,128)}', space=vmem, size = 0x12000, scoped, tag = 'internal scratch']
  #allocation2 [shape = 'f32[72,256]{1,0:T(8,128)}', space=vmem, size = 0x12000, scoped, tag = 'scratch operand']
  %s0 = inlined_call_operand.vmem [shape: f32[2,8,256], index: 0, kind: input, shape index: {}]
  %s1 = inlined_call_operand.vmem [shape: f32[4,8,72], index: 1, kind: input, shape index: {}]
  %s2 = inlined_call_operand.vmem [shape: f32[4,8,1], index: 2, kind: input, shape index: {}]
  %s3 = inlined_call_operand.vmem [shape: f32[16,72], index: 3, kind: input, shape index: {}]
  %s4 = inlined_call_operand.vmem [shape: f32[16,1], index: 4, kind: input, shape index: {}]
  %s5 = inlined_call_operand.vmem [shape: f32[2,8,256], index: 5, kind: output, shape index: {}]
  %s6 = sld [smem:[#allocation0]]
  $region53: #{saab_pallas.1} parent=0
    _
  %s8 = ssub.s32 1, %s6
  %s9 = scalar_select 0, %s8, %s6
  loop: start=0, step=1, limit=4
  $region2: #{saab_pallas.1} parent=0 // loop_pre_header
    _
  $region3: #{saab_pallas.1} parent=0 // loop_header
    %s11 = sphi 0, %s15
    %p12 = scmp.ge.s32.totalorder %s11, 4
    %s21 = sphi 0, %s23
    %s24 = sphi 0, %s21
    %s25 = sphi 0, %s24
    %s41 = sphi 0, %s25
    %s45 = sphi 0, %s45
    %s47 = sphi 0, %s45
    %s48 = sphi 0, %s47
    %s62 = sphi 0, %s48
    %s66 = sphi 0, %s66
    %s68 = sphi 0, %s66
    %s69 = sphi 0, %s68
    %s83 = sphi 0, %s69
    %s87 = sphi 0, %s87
    %s89 = sphi 0, %s87
    %s90 = sphi 0, %s89
    %s104 = sphi 0, %s90
    %s108 = sphi 0, %s108
    %s110 = sphi 0, %s108
    %s111 = sphi 0, %s110
    %s125 = sphi 0, %s111
    %s131 = sphi 0, %s133
    %s134 = sphi 0, %s131
    %s135 = sphi 0, %s134
    %s151 = sphi 0, %s135
  $region4: #{saab_pallas.1} parent=0 // loop_header_branch
    %14 = sbr.rel (%p12) target = $region8
  $region5: #{saab_pallas.1} parent=0 // loop_body
    %s16 = ssub.s32 %s11, 1
    %s17 = ssub.s32 %s11, 2
    %s18 = sadd.s32 %s11, 1
    %s19 = ssub.s32 %s11, %s18
    %p20 = scmp.eq.s32.totalorder %s19, 0
    %s22 = sadd.s32 %s21, 1
    %s23 = scalar_select %p20, %s21, %s22
    %p26 = pneg %p20
    %p27 = scmp.eq.s32.totalorder %s11, 1
    %p28 = por %p26, %p27
    %p29 = scmp.ne.s32.totalorder %s21, %s24
    %p30 = scmp.eq.s32.totalorder %s11, 0
    %p31 = por %p29, %p30
    %p32 = scmp.ne.s32.totalorder %s21, %s24
    %p33 = scmp.eq.s32.totalorder %s16, 1
    %p34 = por %p32, %p33
    %p35 = scmp.ne.s32.totalorder %s24, %s25
    %p36 = scmp.eq.s32.totalorder %s16, 0
    %p37 = por %p35, %p36
    %p38 = scmp.ne.s32.totalorder %s24, %s25
    %p39 = scmp.eq.s32.totalorder %s17, 1
    %p40 = por %p38, %p39
    %p42 = scmp.ne.s32.totalorder %s25, %s41
    %p43 = scmp.eq.s32.totalorder %s17, 0
    %p44 = por %p42, %p43
    %s46 = sadd.s32 %s45, 1
    %p49 = scmp.eq.s32.totalorder %s11, 1
    %p50 = scmp.ne.s32.totalorder %s45, %s47
    %p51 = scmp.eq.s32.totalorder %s11, 0
    %p52 = por %p50, %p51
    %p53 = scmp.ne.s32.totalorder %s45, %s47
    %p54 = scmp.eq.s32.totalorder %s16, 1
    %p55 = por %p53, %p54
    %p56 = scmp.ne.s32.totalorder %s47, %s48
    %p57 = scmp.eq.s32.totalorder %s16, 0
    %p58 = por %p56, %p57
    %p59 = scmp.ne.s32.totalorder %s47, %s48
    %p60 = scmp.eq.s32.totalorder %s17, 1
    %p61 = por %p59, %p60
    %p63 = scmp.ne.s32.totalorder %s48, %s62
    %p64 = scmp.eq.s32.totalorder %s17, 0
    %p65 = por %p63, %p64
    %s67 = sadd.s32 %s66, 1
    %p70 = scmp.eq.s32.totalorder %s11, 1
    %p71 = scmp.ne.s32.totalorder %s66, %s68
    %p72 = scmp.eq.s32.totalorder %s11, 0
    %p73 = por %p71, %p72
    %p74 = scmp.ne.s32.totalorder %s66, %s68
    %p75 = scmp.eq.s32.totalorder %s16, 1
    %p76 = por %p74, %p75
    %p77 = scmp.ne.s32.totalorder %s68, %s69
    %p78 = scmp.eq.s32.totalorder %s16, 0
    %p79 = por %p77, %p78
    %p80 = scmp.ne.s32.totalorder %s68, %s69
    %p81 = scmp.eq.s32.totalorder %s17, 1
    %p82 = por %p80, %p81
    %p84 = scmp.ne.s32.totalorder %s69, %s83
    %p85 = scmp.eq.s32.totalorder %s17, 0
    %p86 = por %p84, %p85
    %s88 = sadd.s32 %s87, 1
    %p91 = scmp.eq.s32.totalorder %s11, 1
    %p92 = scmp.ne.s32.totalorder %s87, %s89
    %p93 = scmp.eq.s32.totalorder %s11, 0
    %p94 = por %p92, %p93
    %p95 = scmp.ne.s32.totalorder %s87, %s89
    %p96 = scmp.eq.s32.totalorder %s16, 1
    %p97 = por %p95, %p96
    %p98 = scmp.ne.s32.totalorder %s89, %s90
    %p99 = scmp.eq.s32.totalorder %s16, 0
    %p100 = por %p98, %p99
    %p101 = scmp.ne.s32.totalorder %s89, %s90
    %p102 = scmp.eq.s32.totalorder %s17, 1
    %p103 = por %p101, %p102
    %p105 = scmp.ne.s32.totalorder %s90, %s104
    %p106 = scmp.eq.s32.totalorder %s17, 0
    %p107 = por %p105, %p106
    %s109 = sadd.s32 %s108, 1
    %p112 = scmp.eq.s32.totalorder %s11, 1
    %p113 = scmp.ne.s32.totalorder %s108, %s110
    %p114 = scmp.eq.s32.totalorder %s11, 0
    %p115 = por %p113, %p114
    %p116 = scmp.ne.s32.totalorder %s108, %s110
    %p117 = scmp.eq.s32.totalorder %s16, 1
    %p118 = por %p116, %p117
    %p119 = scmp.ne.s32.totalorder %s110, %s111
    %p120 = scmp.eq.s32.totalorder %s16, 0
    %p121 = por %p119, %p120
    %p122 = scmp.ne.s32.totalorder %s110, %s111
    %p123 = scmp.eq.s32.totalorder %s17, 1
    %p124 = por %p122, %p123
    %p126 = scmp.ne.s32.totalorder %s111, %s125
    %p127 = scmp.eq.s32.totalorder %s17, 0
    %p128 = por %p126, %p127
    %s129 = ssub.s32 %s11, %s18
    %p130 = scmp.eq.s32.totalorder %s129, 0
    %s132 = sadd.s32 %s131, 1
    %s133 = scalar_select %p130, %s131, %s132
    %p136 = pneg %p130
    %p137 = scmp.eq.s32.totalorder %s11, 1
    %p138 = por %p136, %p137
    %p139 = scmp.ne.s32.totalorder %s131, %s134
    %p140 = scmp.eq.s32.totalorder %s11, 0
    %p141 = por %p139, %p140
    %p142 = scmp.ne.s32.totalorder %s131, %s134
    %p143 = scmp.eq.s32.totalorder %s16, 1
    %p144 = por %p142, %p143
    %p145 = scmp.ne.s32.totalorder %s134, %s135
    %p146 = scmp.eq.s32.totalorder %s16, 0
    %p147 = por %p145, %p146
    %p148 = scmp.ne.s32.totalorder %s134, %s135
    %p149 = scmp.eq.s32.totalorder %s17, 1
    %p150 = por %p148, %p149
    %p152 = scmp.ne.s32.totalorder %s135, %s151
    %p153 = scmp.eq.s32.totalorder %s17, 0
    %p154 = por %p152, %p153
    %p155 = scmp.le.s32.totalorder 1, %s11
    %p156 = scmp.lt.s32.totalorder %s11, 3
    %p157 = pnand %p155, %p156
    %p158 = pneg %p157
    // Predicated region
    $region9: #{saab_pallas.1} parent=5 // pred_check
      _
    $region10: #{saab_pallas.1} parent=5 // pred_check_branch
      %160 = sbr.rel (%p157) target = $region12
    $region11: #{saab_pallas.1} parent=5 // pred_region
      %s161 = ssub.s32 %s11, 1
      // Predicated region
      $region13: #{saab_pallas.1} parent=11 // pred_check
        %p162 = pneg %p58
      $region14: #{saab_pallas.1} parent=11 // pred_check_branch
        %164 = sbr.rel (%p162) target = $region16
      $region15: #{saab_pallas.1} parent=11 // pred_region
        _
      $region16: #{saab_pallas.1} parent=11 // pred_fallthru
        _
      // Predicated region
      $region17: #{saab_pallas.1} parent=11 // pred_check
        %p165 = pneg %p79
      $region18: #{saab_pallas.1} parent=11 // pred_check_branch
        %167 = sbr.rel (%p165) target = $region20
      $region19: #{saab_pallas.1} parent=11 // pred_region
        _
      $region20: #{saab_pallas.1} parent=11 // pred_fallthru
        _
      // Predicated region
      $region21: #{saab_pallas.1} parent=11 // pred_check
        %p168 = pneg %p100
      $region22: #{saab_pallas.1} parent=11 // pred_check_branch
        %170 = sbr.rel (%p168) target = $region24
      $region23: #{saab_pallas.1} parent=11 // pred_region
        _
      $region24: #{saab_pallas.1} parent=11 // pred_fallthru
        _
      // Predicated region
      $region25: #{saab_pallas.1} parent=11 // pred_check
        %p171 = pneg %p121
      $region26: #{saab_pallas.1} parent=11 // pred_check_branch
        %173 = sbr.rel (%p171) target = $region28
      $region27: #{saab_pallas.1} parent=11 // pred_region
        _
      $region28: #{saab_pallas.1} parent=11 // pred_fallthru
        _
    $region12: #{saab_pallas.1} parent=5 // pred_fallthru
      _
    %p174 = scmp.lt.s32.totalorder %s11, 2
    // Predicated region
    $region29: #{saab_pallas.1} parent=5 // pred_check
      %p175 = pneg %p174
    $region30: #{saab_pallas.1} parent=5 // pred_check_branch
      %177 = sbr.rel (%p175) target = $region32
    $region31: #{saab_pallas.1} parent=5 // pred_region
      // Predicated region
      $region33: #{saab_pallas.1} parent=31 // pred_check
        %p178 = pneg %p31
      $region34: #{saab_pallas.1} parent=31 // pred_check_branch
        %180 = sbr.rel (%p178) target = $region36
      $region35: #{saab_pallas.1} parent=31 // pred_region
        %p181 = scmp.lt.s32.totalorder %s11, 1
        %s182 = scalar_select %p181, %s11, 1
        %s183 = smul.addr %s182, 2
        %s184 = smul.addr %s183, 8
        %s185 = scalar_lea.vmem %s0, %s184
      $region36: #{saab_pallas.1} parent=31 // pred_fallthru
        _
    $region32: #{saab_pallas.1} parent=5 // pred_fallthru
      _
    %p186 = scmp.le.s32.totalorder 1, %s11
    %p187 = scmp.lt.s32.totalorder %s11, 3
    %p188 = pnand %p186, %p187
    %p189 = pneg %p188
    // Predicated region
    $region37: #{saab_pallas.1} parent=5 // pred_check
      _
    $region38: #{saab_pallas.1} parent=5 // pred_check_branch
      %191 = sbr.rel (%p188) target = $region40
    $region39: #{saab_pallas.1} parent=5 // pred_region
      %s192 = ssub.s32 %s11, 1
      %p193 = scmp.lt.s32.totalorder %s16, 1
      %s194 = scalar_select %p193, %s16, 1
      %s195 = smul.addr %s194, 2
      %s196 = smul.addr %s195, 8
      %s197 = scalar_lea.vmem %s0, %s196
      %p198 = pneg %p37
      %p199 = pneg %p34
      %p200 = pneg %p58
      %p201 = pneg %p55
      %p202 = pneg %p79
      %p203 = pneg %p76
      %p204 = pneg %p100
      %p205 = pneg %p97
      %p206 = pneg %p121
      %p207 = pneg %p118
      %p208 = pneg %p147
      %p209 = pneg %p144
      %p210 = scmp.lt.s32.totalorder %s16, 1
      %s211 = scalar_select %p210, %s16, 1
      %s212 = smul.addr %s211, 2
      %s213 = smul.addr %s212, 8
      %s214 = scalar_lea.vmem %s5, %s213
      %p215 = scmp.lt.s32.totalorder %s16, 1
      %s216 = scalar_select %p215, %s16, 1
      %s217 = smul.addr %s216, 2
      %s218 = smul.addr %s217, 8
      %s219 = scalar_lea.vmem %s0, %s218
      %p220 = scmp.lt.s32.totalorder %s16, 1
      %s221 = scalar_select %p220, %s16, 1
      %s222 = smul.addr %s221, 2
      %s223 = smul.addr %s222, 8
      %s224 = scalar_lea.vmem %s5, %s223
      %v225 = vld [vmem:[%s219] sm:$0xff]
      %v226 = vld [vmem:[%s219 + $0x8] sm:$0xff]
      %v227 = vlaneseq
      %v228 = vand.u32 %v227, 127
      %v229 = vadd.s32 %v228, 128
      %v230 = vand.u32 %v228, 15
      %v231 = vand.u32 %v229, 15
      %vm232 = vcmp.ge.s32.totalorder %v228, 16
      %vm233 = vcmp.ge.s32.totalorder %v229, 16
      %vm234 = vcmp.ge.s32.totalorder %v230, 1
      %vm235 = vcmp.ge.s32.totalorder %v231, 1
      %vm236 = vmand %vm232, %vm234
      %vm237 = vmand %vm233, %vm235
      %vm238 = vcmp.lt.s32.totalorder %v230, 15
      %vm239 = vcmp.lt.s32.totalorder %v231, 15
      %vm240 = vmand %vm232, %vm238
      %vm241 = vmand %vm233, %vm239
      %vm242 = vcmp.lt.s32.totalorder %v228, 240
      %vm243 = vcmp.lt.s32.totalorder %v229, 240
      %vm244 = vmand %vm242, %vm234
      %vm245 = vmand %vm243, %vm235
      %vm246 = vmand %vm242, %vm238
      %vm247 = vmand %vm243, %vm239
      %248 = vrot.lane.b32.xlu0 %v225, 17
      %v249 = vpop.permute.xlu0 %248
      %250 = vrot.lane.b32.xlu0 %v226, 17
      %v251 = vpop.permute.xlu0 %250
      %vm252 = vcmp.lt.s32.totalorder %v228, 17
      %v253 = vsel %vm252, %v249, %v251
      %v254 = vsel %vm252, %v251, %v249
      %v255 = vsel %vm236, %v254, 0.0
      %v256 = vsel %vm237, %v253, 0.0
      %257 = vst [vmem:[#allocation2] sm:$0xff] %v255
      %258 = vst [vmem:[#allocation2 + $0x8] sm:$0xff] %v256
      %259 = vrot.lane.b32.xlu0 %v225, 16
      %v260 = vpop.permute.xlu0 %259
      %261 = vrot.lane.b32.xlu0 %v226, 16
      %v262 = vpop.permute.xlu0 %261
      %vm263 = vcmp.lt.s32.totalorder %v228, 16
      %v264 = vsel %vm263, %v260, %v262
      %v265 = vsel %vm263, %v262, %v260
      %v266 = vsel %vm232, %v265, 0.0
      %v267 = vsel %vm233, %v264, 0.0
      %268 = vst [vmem:[#allocation2 + $0x10] sm:$0xff] %v266
      %269 = vst [vmem:[#allocation2 + $0x18] sm:$0xff] %v267
      %270 = vrot.lane.b32.xlu0 %v225, 15
      %v271 = vpop.permute.xlu0 %270
      %272 = vrot.lane.b32.xlu0 %v226, 15
      %v273 = vpop.permute.xlu0 %272
      %vm274 = vcmp.lt.s32.totalorder %v228, 15
      %v275 = vsel %vm274, %v271, %v273
      %v276 = vsel %vm274, %v273, %v271
      %v277 = vsel %vm240, %v276, 0.0
      %v278 = vsel %vm241, %v275, 0.0
      %279 = vst [vmem:[#allocation2 + $0x20] sm:$0xff] %v277
      %280 = vst [vmem:[#allocation2 + $0x28] sm:$0xff] %v278
      %281 = vrot.lane.b32.xlu0 %v225, 1
      %v282 = vpop.permute.xlu0 %281
      %283 = vrot.lane.b32.xlu0 %v226, 1
      %v284 = vpop.permute.xlu0 %283
      %vm285 = vcmp.lt.s32.totalorder %v228, 1
      %v286 = vsel %vm285, %v282, %v284
      %v287 = vsel %vm285, %v284, %v282
      %v288 = vsel %vm234, %v287, 0.0
      %v289 = vsel %vm235, %v286, 0.0
      %290 = vst [vmem:[#allocation2 + $0x30] sm:$0xff] %v288
      %291 = vst [vmem:[#allocation2 + $0x38] sm:$0xff] %v289
      %292 = vst [vmem:[#allocation2 + $0x40] sm:$0xff] %v225
      %293 = vst [vmem:[#allocation2 + $0x48] sm:$0xff] %v226
      %294 = vrot.lane.b32.xlu0 %v225, 127
      %v295 = vpop.permute.xlu0 %294
      %296 = vrot.lane.b32.xlu0 %v226, 127
      %v297 = vpop.permute.xlu0 %296
      %vm298 = vcmp.lt.s32.totalorder %v228, 127
      %v299 = vsel %vm298, %v295, %v297
      %v300 = vsel %vm298, %v297, %v295
      %v301 = vsel %vm238, %v299, 0.0
      %v302 = vsel %vm239, %v300, 0.0
      %303 = vst [vmem:[#allocation2 + $0x50] sm:$0xff] %v301
      %304 = vst [vmem:[#allocation2 + $0x58] sm:$0xff] %v302
      %305 = vrot.lane.b32.xlu0 %v225, 113
      %v306 = vpop.permute.xlu0 %305
      %307 = vrot.lane.b32.xlu0 %v226, 113
      %v308 = vpop.permute.xlu0 %307
      %vm309 = vcmp.lt.s32.totalorder %v228, 113
      %v310 = vsel %vm309, %v306, %v308
      %v311 = vsel %vm309, %v308, %v306
      %v312 = vsel %vm244, %v310, 0.0
      %v313 = vsel %vm245, %v311, 0.0
      %314 = vst [vmem:[#allocation2 + $0x60] sm:$0xff] %v312
      %315 = vst [vmem:[#allocation2 + $0x68] sm:$0xff] %v313
      %316 = vrot.lane.b32.xlu0 %v225, 112
      %v317 = vpop.permute.xlu0 %316
      %318 = vrot.lane.b32.xlu0 %v226, 112
      %v319 = vpop.permute.xlu0 %318
      %vm320 = vcmp.lt.s32.totalorder %v228, 112
      %v321 = vsel %vm320, %v317, %v319
      %v322 = vsel %vm320, %v319, %v317
      %v323 = vsel %vm242, %v321, 0.0
      %v324 = vsel %vm243, %v322, 0.0
      %325 = vst [vmem:[#allocation2 + $0x70] sm:$0xff] %v323
      %326 = vst [vmem:[#allocation2 + $0x78] sm:$0xff] %v324
      %327 = vrot.lane.b32.xlu0 %v225, 111
      %v328 = vpop.permute.xlu0 %327
      %329 = vrot.lane.b32.xlu0 %v226, 111
      %v330 = vpop.permute.xlu0 %329
      %vm331 = vcmp.lt.s32.totalorder %v228, 111
      %v332 = vsel %vm331, %v328, %v330
      %v333 = vsel %vm331, %v330, %v328
      %v334 = vsel %vm246, %v332, 0.0
      %v335 = vsel %vm247, %v333, 0.0
      %336 = vst [vmem:[#allocation2 + $0x80] sm:$0xff] %v334
      %337 = vst [vmem:[#allocation2 + $0x88] sm:$0xff] %v335
      %v338 = vld [vmem:[#allocation2] sm:$0xff]
      %v339 = vld [vmem:[#allocation2 + $0x8] sm:$0xff]
      %v340 = vld [vmem:[#allocation2 + $0x10] sm:$0xff]
      %v341 = vld [vmem:[#allocation2 + $0x18] sm:$0xff]
      %v342 = vld [vmem:[#allocation2 + $0x20] sm:$0xff]
      %v343 = vld [vmem:[#allocation2 + $0x28] sm:$0xff]
      %v344 = vld [vmem:[#allocation2 + $0x30] sm:$0xff]
      %v345 = vld [vmem:[#allocation2 + $0x38] sm:$0xff]
      %v346 = vld [vmem:[#allocation2 + $0x40] sm:$0xff]
      %v347 = vld [vmem:[#allocation2 + $0x48] sm:$0xff]
      %v348 = vld [vmem:[#allocation2 + $0x50] sm:$0xff]
      %v349 = vld [vmem:[#allocation2 + $0x58] sm:$0xff]
      %v350 = vld [vmem:[#allocation2 + $0x60] sm:$0xff]
      %v351 = vld [vmem:[#allocation2 + $0x68] sm:$0xff]
      %v352 = vld [vmem:[#allocation2 + $0x70] sm:$0xff]
      %v353 = vld [vmem:[#allocation2 + $0x78] sm:$0xff]
      %v354 = vld [vmem:[#allocation2 + $0x80] sm:$0xff]
      %v355 = vld [vmem:[#allocation2 + $0x88] sm:$0xff]
      %v356 = vld [vmem:[%s1] sm:$0xff]
      %v357 = vld [vmem:[%s2] sm:$0xff]
      %359 = vset.pattern.permute.xlu0 0
      %360 = vperm.xlu0 %359, %v357
      %v361 = vpop.permute.xlu0 %360
      %vm363 = vcmask 588800
      %v365 = vsel %vm363, %v356, 0
      %367 = vmatprep.subr.mxu0 %v339
      %368 = vmatpush1.msra.mxu0 %v338
      %369 = vmatprep.subr.mxu0 %v341
      %370 = vmatpush1.msra.mxu0 %v340
      %371 = vmatprep.subr.mxu0 %v343
      %372 = vmatpush1.msra.mxu0 %v342
      %373 = vmatprep.subr.mxu0 %v345
      %374 = vmatpush1.msra.mxu0 %v344
      %375 = vmatprep.subr.mxu0 %v347
      %376 = vmatpush1.msra.mxu0 %v346
      %377 = vmatprep.subr.mxu0 %v349
      %378 = vmatpush1.msra.mxu0 %v348
      %379 = vmatprep.subr.mxu0 %v351
      %380 = vmatpush1.msra.mxu0 %v350
      %381 = vmatprep.subr.mxu0 %v353
      %382 = vmatpush1.msra.mxu0 %v352
      %383 = vmatprep.subr.mxu0 %v355
      %384 = vmatpush1.msra.mxu0 %v354
      %385 = vmatprep.subr.mxu0 0.0
      %386 = vmatpush1.msra.mxu0 0.0
      %387 = vmatprep.subr.mxu0 0.0
      %388 = vmatpush1.msra.mxu0 0.0
      %389 = vmatprep.subr.mxu0 0.0
      %390 = vmatpush1.msra.mxu0 0.0
      %391 = vmatprep.subr.mxu0 0.0
      %392 = vmatpush1.msra.mxu0 0.0
      %393 = vmatprep.subr.mxu0 0.0
      %394 = vmatpush1.msra.mxu0 0.0
      %395 = vmatprep.subr.mxu0 0.0
      %396 = vmatpush1.msra.mxu0 0.0
      %397 = vmatprep.subr.mxu0 0.0
      %398 = vmatpush1.msra.mxu0 0.0
      %399 = vmatprep.subr.mxu0 0.0
      %400 = vmatpush1.msra.mxu0 0.0
      %401 = vmatprep.subr.mxu0 0.0
      %402 = vmatpush1.msra.mxu0 0.0
      %403 = vmatprep.subr.mxu0 0.0
      %404 = vmatpush1.msra.mxu0 0.0
      %405 = vmatprep.subr.mxu0 0.0
      %406 = vmatpush1.msra.mxu0 0.0
      %407 = vmatprep.subr.mxu0 0.0
      %408 = vmatpush1.msra.mxu0 0.0
      %409 = vmatprep.subr.mxu0 0.0
      %410 = vmatpush1.msra.mxu0 0.0
      %411 = vmatprep.subr.mxu0 0.0
      %412 = vmatpush1.msra.mxu0 0.0
      %413 = vmatprep.subr.mxu0 0.0
      %414 = vmatpush1.msra.mxu0 0.0
      %415 = vmatprep.subr.mxu0 0.0
      %416 = vmatpush1.msra.mxu0 0.0
      %417 = vmatprep.subr.mxu0 0.0
      %418 = vmatpush1.msra.mxu0 0.0
      %419 = vmatprep.subr.mxu0 0.0
      %420 = vmatpush1.msra.mxu0 0.0
      %421 = vmatprep.subr.mxu0 0.0
      %422 = vmatpush1.msra.mxu0 0.0
      %423 = vmatprep.subr.mxu0 0.0
      %424 = vmatpush1.msra.mxu0 0.0
      %425 = vmatprep.subr.mxu0 0.0
      %426 = vmatpush1.msra.mxu0 0.0
      %427 = vmatprep.subr.mxu0 0.0
      %428 = vmatpush1.msra.mxu0 0.0
      %429 = vmatprep.subr.mxu0 0.0
      %430 = vmatpush1.msra.mxu0 0.0
      %431 = vmatprep.mubr.f32.mxu0 0.0
      %432 = vmatmul.mubr.f32.gmra.mrb[0].mxu0 %v365
      %v433 = vpop.f32.mrb[0].mxu0
      %v434 = vadd.f32 %v361, %v433
      %v435 = vpop.f32.mrb[0].mxu0
      %v436 = vadd.f32 %v361, %v435
      %437 = vdwg.mxu0
      %v438 = vmax.f32 %v434, 0.0
      %v439 = vmax.f32 %v436, 0.0
      %440 = vrot.lane.b32.xlu0 %v438, 17
      %v441 = vpop.permute.xlu0 %440
      %442 = vrot.lane.b32.xlu0 %v439, 17
      %v443 = vpop.permute.xlu0 %442
      %v444 = vsel %vm252, %v441, %v443
      %v445 = vsel %vm252, %v443, %v441
      %v446 = vsel %vm236, %v445, 0.0
      %v447 = vsel %vm237, %v444, 0.0
      %448 = vst [vmem:[#allocation2] sm:$0xff] %v446
      %449 = vst [vmem:[#allocation2 + $0x8] sm:$0xff] %v447
      %450 = vrot.lane.b32.xlu0 %v438, 16
      %v451 = vpop.permute.xlu0 %450
      %452 = vrot.lane.b32.xlu0 %v439, 16
      %v453 = vpop.permute.xlu0 %452
      %v454 = vsel %vm263, %v451, %v453
      %v455 = vsel %vm263, %v453, %v451
      %v456 = vsel %vm232, %v455, 0.0
      %v457 = vsel %vm233, %v454, 0.0
      %458 = vst [vmem:[#allocation2 + $0x10] sm:$0xff] %v456
      %459 = vst [vmem:[#allocation2 + $0x18] sm:$0xff] %v457
      %460 = vrot.lane.b32.xlu0 %v438, 15
      %v461 = vpop.permute.xlu0 %460
      %462 = vrot.lane.b32.xlu0 %v439, 15
      %v463 = vpop.permute.xlu0 %462
      %v464 = vsel %vm274, %v461, %v463
      %v465 = vsel %vm274, %v463, %v461
      %v466 = vsel %vm240, %v465, 0.0
      %v467 = vsel %vm241, %v464, 0.0
      %468 = vst [vmem:[#allocation2 + $0x20] sm:$0xff] %v466
      %469 = vst [vmem:[#allocation2 + $0x28] sm:$0xff] %v467
      %470 = vrot.lane.b32.xlu0 %v438, 1
      %v471 = vpop.permute.xlu0 %470
      %472 = vrot.lane.b32.xlu0 %v439, 1
      %v473 = vpop.permute.xlu0 %472
      %v474 = vsel %vm285, %v471, %v473
      %v475 = vsel %vm285, %v473, %v471
      %v476 = vsel %vm234, %v475, 0.0
      %v477 = vsel %vm235, %v474, 0.0
      %478 = vst [vmem:[#allocation2 + $0x30] sm:$0xff] %v476
      %479 = vst [vmem:[#allocation2 + $0x38] sm:$0xff] %v477
      %480 = vst [vmem:[#allocation2 + $0x40] sm:$0xff] %v438
      %481 = vst [vmem:[#allocation2 + $0x48] sm:$0xff] %v439
      %482 = vrot.lane.b32.xlu0 %v438, 127
      %v483 = vpop.permute.xlu0 %482
      %484 = vrot.lane.b32.xlu0 %v439, 127
      %v485 = vpop.permute.xlu0 %484
      %v486 = vsel %vm298, %v483, %v485
      %v487 = vsel %vm298, %v485, %v483
      %v488 = vsel %vm238, %v486, 0.0
      %v489 = vsel %vm239, %v487, 0.0
      %490 = vst [vmem:[#allocation2 + $0x50] sm:$0xff] %v488
      %491 = vst [vmem:[#allocation2 + $0x58] sm:$0xff] %v489
      %492 = vrot.lane.b32.xlu0 %v438, 113
      %v493 = vpop.permute.xlu0 %492
      %494 = vrot.lane.b32.xlu0 %v439, 113
      %v495 = vpop.permute.xlu0 %494
      %v496 = vsel %vm309, %v493, %v495
      %v497 = vsel %vm309, %v495, %v493
      %v498 = vsel %vm244, %v496, 0.0
      %v499 = vsel %vm245, %v497, 0.0
      %500 = vst [vmem:[#allocation2 + $0x60] sm:$0xff] %v498
      %501 = vst [vmem:[#allocation2 + $0x68] sm:$0xff] %v499
      %502 = vrot.lane.b32.xlu0 %v438, 112
      %v503 = vpop.permute.xlu0 %502
      %504 = vrot.lane.b32.xlu0 %v439, 112
      %v505 = vpop.permute.xlu0 %504
      %v506 = vsel %vm320, %v503, %v505
      %v507 = vsel %vm320, %v505, %v503
      %v508 = vsel %vm242, %v506, 0.0
      %v509 = vsel %vm243, %v507, 0.0
      %510 = vst [vmem:[#allocation2 + $0x70] sm:$0xff] %v508
      %511 = vst [vmem:[#allocation2 + $0x78] sm:$0xff] %v509
      %512 = vrot.lane.b32.xlu0 %v438, 111
      %v513 = vpop.permute.xlu0 %512
      %514 = vrot.lane.b32.xlu0 %v439, 111
      %v515 = vpop.permute.xlu0 %514
      %v516 = vsel %vm331, %v513, %v515
      %v517 = vsel %vm331, %v515, %v513
      %v518 = vsel %vm246, %v516, 0.0
      %v519 = vsel %vm247, %v517, 0.0
      %520 = vst [vmem:[#allocation2 + $0x80] sm:$0xff] %v518
      %521 = vst [vmem:[#allocation2 + $0x88] sm:$0xff] %v519
      %v522 = vld [vmem:[#allocation2] sm:$0xff]
      %v523 = vld [vmem:[#allocation2 + $0x8] sm:$0xff]
      %v524 = vld [vmem:[#allocation2 + $0x10] sm:$0xff]
      %v525 = vld [vmem:[#allocation2 + $0x18] sm:$0xff]
      %v526 = vld [vmem:[#allocation2 + $0x20] sm:$0xff]
      %v527 = vld [vmem:[#allocation2 + $0x28] sm:$0xff]
      %v528 = vld [vmem:[#allocation2 + $0x30] sm:$0xff]
      %v529 = vld [vmem:[#allocation2 + $0x38] sm:$0xff]
      %v530 = vld [vmem:[#allocation2 + $0x40] sm:$0xff]
      %v531 = vld [vmem:[#allocation2 + $0x48] sm:$0xff]
      %v532 = vld [vmem:[#allocation2 + $0x50] sm:$0xff]
      %v533 = vld [vmem:[#allocation2 + $0x58] sm:$0xff]
      %v534 = vld [vmem:[#allocation2 + $0x60] sm:$0xff]
      %v535 = vld [vmem:[#allocation2 + $0x68] sm:$0xff]
      %v536 = vld [vmem:[#allocation2 + $0x70] sm:$0xff]
      %v537 = vld [vmem:[#allocation2 + $0x78] sm:$0xff]
      %v538 = vld [vmem:[#allocation2 + $0x80] sm:$0xff]
      %v539 = vld [vmem:[#allocation2 + $0x88] sm:$0xff]
      %s540 = scalar_lea.vmem %s1, 8
      %v541 = vld [vmem:[%s540] sm:$0xff]
      %s542 = scalar_lea.vmem %s2, 8
      %v543 = vld [vmem:[%s542] sm:$0xff]
      %545 = vset.pattern.permute.xlu0 0
      %546 = vperm.xlu0 %545, %v543
      %v547 = vpop.permute.xlu0 %546
      %v550 = vsel %vm363, %v541, 0
      %552 = vmatprep.subr.mxu0 %v523
      %553 = vmatpush1.msra.mxu0 %v522
      %554 = vmatprep.subr.mxu0 %v525
      %555 = vmatpush1.msra.mxu0 %v524
      %556 = vmatprep.subr.mxu0 %v527
      %557 = vmatpush1.msra.mxu0 %v526
      %558 = vmatprep.subr.mxu0 %v529
      %559 = vmatpush1.msra.mxu0 %v528
      %560 = vmatprep.subr.mxu0 %v531
      %561 = vmatpush1.msra.mxu0 %v530
      %562 = vmatprep.subr.mxu0 %v533
      %563 = vmatpush1.msra.mxu0 %v532
      %564 = vmatprep.subr.mxu0 %v535
      %565 = vmatpush1.msra.mxu0 %v534
      %566 = vmatprep.subr.mxu0 %v537
      %567 = vmatpush1.msra.mxu0 %v536
      %568 = vmatprep.subr.mxu0 %v539
      %569 = vmatpush1.msra.mxu0 %v538
      %570 = vmatprep.subr.mxu0 0.0
      %571 = vmatpush1.msra.mxu0 0.0
      %572 = vmatprep.subr.mxu0 0.0
      %573 = vmatpush1.msra.mxu0 0.0
      %574 = vmatprep.subr.mxu0 0.0
      %575 = vmatpush1.msra.mxu0 0.0
      %576 = vmatprep.subr.mxu0 0.0
      %577 = vmatpush1.msra.mxu0 0.0
      %578 = vmatprep.subr.mxu0 0.0
      %579 = vmatpush1.msra.mxu0 0.0
      %580 = vmatprep.subr.mxu0 0.0
      %581 = vmatpush1.msra.mxu0 0.0
      %582 = vmatprep.subr.mxu0 0.0
      %583 = vmatpush1.msra.mxu0 0.0
      %584 = vmatprep.subr.mxu0 0.0
      %585 = vmatpush1.msra.mxu0 0.0
      %586 = vmatprep.subr.mxu0 0.0
      %587 = vmatpush1.msra.mxu0 0.0
      %588 = vmatprep.subr.mxu0 0.0
      %589 = vmatpush1.msra.mxu0 0.0
      %590 = vmatprep.subr.mxu0 0.0
      %591 = vmatpush1.msra.mxu0 0.0
      %592 = vmatprep.subr.mxu0 0.0
      %593 = vmatpush1.msra.mxu0 0.0
      %594 = vmatprep.subr.mxu0 0.0
      %595 = vmatpush1.msra.mxu0 0.0
      %596 = vmatprep.subr.mxu0 0.0
      %597 = vmatpush1.msra.mxu0 0.0
      %598 = vmatprep.subr.mxu0 0.0
      %599 = vmatpush1.msra.mxu0 0.0
      %600 = vmatprep.subr.mxu0 0.0
      %601 = vmatpush1.msra.mxu0 0.0
      %602 = vmatprep.subr.mxu0 0.0
      %603 = vmatpush1.msra.mxu0 0.0
      %604 = vmatprep.subr.mxu0 0.0
      %605 = vmatpush1.msra.mxu0 0.0
      %606 = vmatprep.subr.mxu0 0.0
      %607 = vmatpush1.msra.mxu0 0.0
      %608 = vmatprep.subr.mxu0 0.0
      %609 = vmatpush1.msra.mxu0 0.0
      %610 = vmatprep.subr.mxu0 0.0
      %611 = vmatpush1.msra.mxu0 0.0
      %612 = vmatprep.subr.mxu0 0.0
      %613 = vmatpush1.msra.mxu0 0.0
      %614 = vmatprep.subr.mxu0 0.0
      %615 = vmatpush1.msra.mxu0 0.0
      %616 = vmatprep.mubr.f32.mxu0 0.0
      %617 = vmatmul.mubr.f32.gmra.mrb[0].mxu0 %v550
      %v618 = vpop.f32.mrb[0].mxu0
      %v619 = vadd.f32 %v547, %v618
      %v620 = vpop.f32.mrb[0].mxu0
      %v621 = vadd.f32 %v547, %v620
      %622 = vdwg.mxu0
      %623 = vrot.lane.b32.xlu0 %v619, 17
      %v624 = vpop.permute.xlu0 %623
      %625 = vrot.lane.b32.xlu0 %v621, 17
      %v626 = vpop.permute.xlu0 %625
      %v627 = vsel %vm252, %v624, %v626
      %v628 = vsel %vm252, %v626, %v624
      %v629 = vsel %vm236, %v628, 0.0
      %v630 = vsel %vm237, %v627, 0.0
      %631 = vst [vmem:[#allocation2] sm:$0xff] %v629
      %632 = vst [vmem:[#allocation2 + $0x8] sm:$0xff] %v630
      %633 = vrot.lane.b32.xlu0 %v619, 16
      %v634 = vpop.permute.xlu0 %633
      %635 = vrot.lane.b32.xlu0 %v621, 16
      %v636 = vpop.permute.xlu0 %635
      %v637 = vsel %vm263, %v634, %v636
      %v638 = vsel %vm263, %v636, %v634
      %v639 = vsel %vm232, %v638, 0.0
      %v640 = vsel %vm233, %v637, 0.0
      %641 = vst [vmem:[#allocation2 + $0x10] sm:$0xff] %v639
      %642 = vst [vmem:[#allocation2 + $0x18] sm:$0xff] %v640
      %643 = vrot.lane.b32.xlu0 %v619, 15
      %v644 = vpop.permute.xlu0 %643
      %645 = vrot.lane.b32.xlu0 %v621, 15
      %v646 = vpop.permute.xlu0 %645
      %v647 = vsel %vm274, %v644, %v646
      %v648 = vsel %vm274, %v646, %v644
      %v649 = vsel %vm240, %v648, 0.0
      %v650 = vsel %vm241, %v647, 0.0
      %651 = vst [vmem:[#allocation2 + $0x20] sm:$0xff] %v649
      %652 = vst [vmem:[#allocation2 + $0x28] sm:$0xff] %v650
      %653 = vrot.lane.b32.xlu0 %v619, 1
      %v654 = vpop.permute.xlu0 %653
      %655 = vrot.lane.b32.xlu0 %v621, 1
      %v656 = vpop.permute.xlu0 %655
      %v657 = vsel %vm285, %v654, %v656
      %v658 = vsel %vm285, %v656, %v654
      %v659 = vsel %vm234, %v658, 0.0
      %v660 = vsel %vm235, %v657, 0.0
      %661 = vst [vmem:[#allocation2 + $0x30] sm:$0xff] %v659
      %662 = vst [vmem:[#allocation2 + $0x38] sm:$0xff] %v660
      %663 = vst [vmem:[#allocation2 + $0x40] sm:$0xff] %v619
      %664 = vst [vmem:[#allocation2 + $0x48] sm:$0xff] %v621
      %665 = vrot.lane.b32.xlu0 %v619, 127
      %v666 = vpop.permute.xlu0 %665
      %667 = vrot.lane.b32.xlu0 %v621, 127
      %v668 = vpop.permute.xlu0 %667
      %v669 = vsel %vm298, %v666, %v668
      %v670 = vsel %vm298, %v668, %v666
      %v671 = vsel %vm238, %v669, 0.0
      %v672 = vsel %vm239, %v670, 0.0
      %673 = vst [vmem:[#allocation2 + $0x50] sm:$0xff] %v671
      %674 = vst [vmem:[#allocation2 + $0x58] sm:$0xff] %v672
      %675 = vrot.lane.b32.xlu0 %v619, 113
      %v676 = vpop.permute.xlu0 %675
      %677 = vrot.lane.b32.xlu0 %v621, 113
      %v678 = vpop.permute.xlu0 %677
      %v679 = vsel %vm309, %v676, %v678
      %v680 = vsel %vm309, %v678, %v676
      %v681 = vsel %vm244, %v679, 0.0
      %v682 = vsel %vm245, %v680, 0.0
      %683 = vst [vmem:[#allocation2 + $0x60] sm:$0xff] %v681
      %684 = vst [vmem:[#allocation2 + $0x68] sm:$0xff] %v682
      %685 = vrot.lane.b32.xlu0 %v619, 112
      %v686 = vpop.permute.xlu0 %685
      %687 = vrot.lane.b32.xlu0 %v621, 112
      %v688 = vpop.permute.xlu0 %687
      %v689 = vsel %vm320, %v686, %v688
      %v690 = vsel %vm320, %v688, %v686
      %v691 = vsel %vm242, %v689, 0.0
      %v692 = vsel %vm243, %v690, 0.0
      %693 = vst [vmem:[#allocation2 + $0x70] sm:$0xff] %v691
      %694 = vst [vmem:[#allocation2 + $0x78] sm:$0xff] %v692
      %695 = vrot.lane.b32.xlu0 %v619, 111
      %v696 = vpop.permute.xlu0 %695
      %697 = vrot.lane.b32.xlu0 %v621, 111
      %v698 = vpop.permute.xlu0 %697
      %v699 = vsel %vm331, %v696, %v698
      %v700 = vsel %vm331, %v698, %v696
      %v701 = vsel %vm246, %v699, 0.0
      %v702 = vsel %vm247, %v700, 0.0
      %703 = vst [vmem:[#allocation2 + $0x80] sm:$0xff] %v701
      %704 = vst [vmem:[#allocation2 + $0x88] sm:$0xff] %v702
      %v705 = vld [vmem:[#allocation2] sm:$0xff]
      %v706 = vld [vmem:[#allocation2 + $0x8] sm:$0xff]
      %v707 = vld [vmem:[#allocation2 + $0x10] sm:$0xff]
      %v708 = vld [vmem:[#allocation2 + $0x18] sm:$0xff]
      %v709 = vld [vmem:[#allocation2 + $0x20] sm:$0xff]
      %v710 = vld [vmem:[#allocation2 + $0x28] sm:$0xff]
      %v711 = vld [vmem:[#allocation2 + $0x30] sm:$0xff]
      %v712 = vld [vmem:[#allocation2 + $0x38] sm:$0xff]
      %v713 = vld [vmem:[#allocation2 + $0x40] sm:$0xff]
      %v714 = vld [vmem:[#allocation2 + $0x48] sm:$0xff]
      %v715 = vld [vmem:[#allocation2 + $0x50] sm:$0xff]
      %v716 = vld [vmem:[#allocation2 + $0x58] sm:$0xff]
      %v717 = vld [vmem:[#allocation2 + $0x60] sm:$0xff]
      %v718 = vld [vmem:[#allocation2 + $0x68] sm:$0xff]
      %v719 = vld [vmem:[#allocation2 + $0x70] sm:$0xff]
      %v720 = vld [vmem:[#allocation2 + $0x78] sm:$0xff]
      %v721 = vld [vmem:[#allocation2 + $0x80] sm:$0xff]
      %v722 = vld [vmem:[#allocation2 + $0x88] sm:$0xff]
      %v723 = vld [vmem:[%s3] sm:$0xff]
      %v724 = vld [vmem:[%s3 + $0x8] sm:$0xff]
      %v725 = vld [vmem:[%s4] sm:$0xff]
      %v726 = vld [vmem:[%s4 + $0x8] sm:$0xff]
      %728 = vset.pattern.permute.xlu0 0
      %729 = vperm.xlu0 %728, %v725
      %v730 = vpop.permute.xlu0 %729
      %733 = vset.pattern.permute.xlu0 0
      %734 = vperm.xlu0 %733, %v726
      %v735 = vpop.permute.xlu0 %734
      %v738 = vsel %vm363, %v723, 0
      %v741 = vsel %vm363, %v724, 0
      %743 = vmatprep.subr.mxu0 %v706
      %744 = vmatpush1.msra.mxu0 %v705
      %745 = vmatprep.subr.mxu0 %v708
      %746 = vmatpush1.msra.mxu0 %v707
      %747 = vmatprep.subr.mxu0 %v710
      %748 = vmatpush1.msra.mxu0 %v709
      %749 = vmatprep.subr.mxu0 %v712
      %750 = vmatpush1.msra.mxu0 %v711
      %751 = vmatprep.subr.mxu0 %v714
      %752 = vmatpush1.msra.mxu0 %v713
      %753 = vmatprep.subr.mxu0 %v716
      %754 = vmatpush1.msra.mxu0 %v715
      %755 = vmatprep.subr.mxu0 %v718
      %756 = vmatpush1.msra.mxu0 %v717
      %757 = vmatprep.subr.mxu0 %v720
      %758 = vmatpush1.msra.mxu0 %v719
      %759 = vmatprep.subr.mxu0 %v722
      %760 = vmatpush1.msra.mxu0 %v721
      %761 = vmatprep.subr.mxu0 0.0
      %762 = vmatpush1.msra.mxu0 0.0
      %763 = vmatprep.subr.mxu0 0.0
      %764 = vmatpush1.msra.mxu0 0.0
      %765 = vmatprep.subr.mxu0 0.0
      %766 = vmatpush1.msra.mxu0 0.0
      %767 = vmatprep.subr.mxu0 0.0
      %768 = vmatpush1.msra.mxu0 0.0
      %769 = vmatprep.subr.mxu0 0.0
      %770 = vmatpush1.msra.mxu0 0.0
      %771 = vmatprep.subr.mxu0 0.0
      %772 = vmatpush1.msra.mxu0 0.0
      %773 = vmatprep.subr.mxu0 0.0
      %774 = vmatpush1.msra.mxu0 0.0
      %775 = vmatprep.subr.mxu0 0.0
      %776 = vmatpush1.msra.mxu0 0.0
      %777 = vmatprep.subr.mxu0 0.0
      %778 = vmatpush1.msra.mxu0 0.0
      %779 = vmatprep.subr.mxu0 0.0
      %780 = vmatpush1.msra.mxu0 0.0
      %781 = vmatprep.subr.mxu0 0.0
      %782 = vmatpush1.msra.mxu0 0.0
      %783 = vmatprep.subr.mxu0 0.0
      %784 = vmatpush1.msra.mxu0 0.0
      %785 = vmatprep.subr.mxu0 0.0
      %786 = vmatpush1.msra.mxu0 0.0
      %787 = vmatprep.subr.mxu0 0.0
      %788 = vmatpush1.msra.mxu0 0.0
      %789 = vmatprep.subr.mxu0 0.0
      %790 = vmatpush1.msra.mxu0 0.0
      %791 = vmatprep.subr.mxu0 0.0
      %792 = vmatpush1.msra.mxu0 0.0
      %793 = vmatprep.subr.mxu0 0.0
      %794 = vmatpush1.msra.mxu0 0.0
      %795 = vmatprep.subr.mxu0 0.0
      %796 = vmatpush1.msra.mxu0 0.0
      %797 = vmatprep.subr.mxu0 0.0
      %798 = vmatpush1.msra.mxu0 0.0
      %799 = vmatprep.subr.mxu0 0.0
      %800 = vmatpush1.msra.mxu0 0.0
      %801 = vmatprep.subr.mxu0 0.0
      %802 = vmatpush1.msra.mxu0 0.0
      %803 = vmatprep.subr.mxu0 0.0
      %804 = vmatpush1.msra.mxu0 0.0
      %805 = vmatprep.subr.mxu0 0.0
      %806 = vmatpush1.msra.mxu0 0.0
      %807 = vmatprep.mubr.f32.mxu0 0.0
      %808 = vmatmul.mubr.f32.gmra.mrb[0].mxu0 %v738
      %v809 = vpop.f32.mrb[0].mxu0
      %v810 = vadd.f32 %v730, %v809
      %v811 = vpop.f32.mrb[0].mxu0
      %v812 = vadd.f32 %v730, %v811
      %813 = vmatprep.mubr.f32.mxu0 0.0
      %814 = vmatmul.mubr.f32.gmra.mrb[0].mxu0 %v741
      %v815 = vpop.f32.mrb[0].mxu0
      %v816 = vadd.f32 %v735, %v815
      %v817 = vpop.f32.mrb[0].mxu0
      %v818 = vadd.f32 %v735, %v817
      %819 = vdwg.mxu0
      %v820 = vmul.f32 %v810, 0.2
      %v821 = vmul.f32 %v812, 0.2
      %v822 = vmax.f32 %v810, %v820
      %v823 = vmax.f32 %v812, %v821
      %v824 = vmul.f32 %v816, 0.2
      %v825 = vmul.f32 %v818, 0.2
      %v826 = vmax.f32 %v816, %v824
      %v827 = vmax.f32 %v818, %v825
      %828 = vrot.lane.b32.xlu0 %v822, 17
      %v829 = vpop.permute.xlu0 %828
      %830 = vrot.lane.b32.xlu0 %v823, 17
      %v831 = vpop.permute.xlu0 %830
      %v832 = vsel %vm252, %v829, %v831
      %v833 = vsel %vm252, %v831, %v829
      %v834 = vsel %vm236, %v833, 0.0
      %v835 = vsel %vm237, %v832, 0.0
      %836 = vst [vmem:[#allocation2] sm:$0xff] %v834
      %837 = vst [vmem:[#allocation2 + $0x8] sm:$0xff] %v835
      %838 = vrot.lane.b32.xlu0 %v822, 16
      %v839 = vpop.permute.xlu0 %838
      %840 = vrot.lane.b32.xlu0 %v823, 16
      %v841 = vpop.permute.xlu0 %840
      %v842 = vsel %vm263, %v839, %v841
      %v843 = vsel %vm263, %v841, %v839
      %v844 = vsel %vm232, %v843, 0.0
      %v845 = vsel %vm233, %v842, 0.0
      %846 = vst [vmem:[#allocation2 + $0x10] sm:$0xff] %v844
      %847 = vst [vmem:[#allocation2 + $0x18] sm:$0xff] %v845
      %848 = vrot.lane.b32.xlu0 %v822, 15
      %v849 = vpop.permute.xlu0 %848
      %850 = vrot.lane.b32.xlu0 %v823, 15
      %v851 = vpop.permute.xlu0 %850
      %v852 = vsel %vm274, %v849, %v851
      %v853 = vsel %vm274, %v851, %v849
      %v854 = vsel %vm240, %v853, 0.0
      %v855 = vsel %vm241, %v852, 0.0
      %856 = vst [vmem:[#allocation2 + $0x20] sm:$0xff] %v854
      %857 = vst [vmem:[#allocation2 + $0x28] sm:$0xff] %v855
      %858 = vrot.lane.b32.xlu0 %v822, 1
      %v859 = vpop.permute.xlu0 %858
      %860 = vrot.lane.b32.xlu0 %v823, 1
      %v861 = vpop.permute.xlu0 %860
      %v862 = vsel %vm285, %v859, %v861
      %v863 = vsel %vm285, %v861, %v859
      %v864 = vsel %vm234, %v863, 0.0
      %v865 = vsel %vm235, %v862, 0.0
      %866 = vst [vmem:[#allocation2 + $0x30] sm:$0xff] %v864
      %867 = vst [vmem:[#allocation2 + $0x38] sm:$0xff] %v865
      %868 = vst [vmem:[#allocation2 + $0x40] sm:$0xff] %v822
      %869 = vst [vmem:[#allocation2 + $0x48] sm:$0xff] %v823
      %870 = vrot.lane.b32.xlu0 %v822, 127
      %v871 = vpop.permute.xlu0 %870
      %872 = vrot.lane.b32.xlu0 %v823, 127
      %v873 = vpop.permute.xlu0 %872
      %v874 = vsel %vm298, %v871, %v873
      %v875 = vsel %vm298, %v873, %v871
      %v876 = vsel %vm238, %v874, 0.0
      %v877 = vsel %vm239, %v875, 0.0
      %878 = vst [vmem:[#allocation2 + $0x50] sm:$0xff] %v876
      %879 = vst [vmem:[#allocation2 + $0x58] sm:$0xff] %v877
      %880 = vrot.lane.b32.xlu0 %v822, 113
      %v881 = vpop.permute.xlu0 %880
      %882 = vrot.lane.b32.xlu0 %v823, 113
      %v883 = vpop.permute.xlu0 %882
      %v884 = vsel %vm309, %v881, %v883
      %v885 = vsel %vm309, %v883, %v881
      %v886 = vsel %vm244, %v884, 0.0
      %v887 = vsel %vm245, %v885, 0.0
      %888 = vst [vmem:[#allocation2 + $0x60] sm:$0xff] %v886
      %889 = vst [vmem:[#allocation2 + $0x68] sm:$0xff] %v887
      %890 = vrot.lane.b32.xlu0 %v822, 112
      %v891 = vpop.permute.xlu0 %890
      %892 = vrot.lane.b32.xlu0 %v823, 112
      %v893 = vpop.permute.xlu0 %892
      %v894 = vsel %vm320, %v891, %v893
      %v895 = vsel %vm320, %v893, %v891
      %v896 = vsel %vm242, %v894, 0.0
      %v897 = vsel %vm243, %v895, 0.0
      %898 = vst [vmem:[#allocation2 + $0x70] sm:$0xff] %v896
      %899 = vst [vmem:[#allocation2 + $0x78] sm:$0xff] %v897
      %900 = vrot.lane.b32.xlu0 %v822, 111
      %v901 = vpop.permute.xlu0 %900
      %902 = vrot.lane.b32.xlu0 %v823, 111
      %v903 = vpop.permute.xlu0 %902
      %v904 = vsel %vm331, %v901, %v903
      %v905 = vsel %vm331, %v903, %v901
      %v906 = vsel %vm246, %v904, 0.0
      %v907 = vsel %vm247, %v905, 0.0
      %908 = vst [vmem:[#allocation2 + $0x80] sm:$0xff] %v906
      %909 = vst [vmem:[#allocation2 + $0x88] sm:$0xff] %v907
      %v910 = vld [vmem:[#allocation2] sm:$0xff]
      %v911 = vld [vmem:[#allocation2 + $0x8] sm:$0xff]
      %v912 = vld [vmem:[#allocation2 + $0x10] sm:$0xff]
      %v913 = vld [vmem:[#allocation2 + $0x18] sm:$0xff]
      %v914 = vld [vmem:[#allocation2 + $0x20] sm:$0xff]
      %v915 = vld [vmem:[#allocation2 + $0x28] sm:$0xff]
      %v916 = vld [vmem:[#allocation2 + $0x30] sm:$0xff]
      %v917 = vld [vmem:[#allocation2 + $0x38] sm:$0xff]
      %v918 = vld [vmem:[#allocation2 + $0x40] sm:$0xff]
      %v919 = vld [vmem:[#allocation2 + $0x48] sm:$0xff]
      %v920 = vld [vmem:[#allocation2 + $0x50] sm:$0xff]
      %v921 = vld [vmem:[#allocation2 + $0x58] sm:$0xff]
      %v922 = vld [vmem:[#allocation2 + $0x60] sm:$0xff]
      %v923 = vld [vmem:[#allocation2 + $0x68] sm:$0xff]
      %v924 = vld [vmem:[#allocation2 + $0x70] sm:$0xff]
      %v925 = vld [vmem:[#allocation2 + $0x78] sm:$0xff]
      %v926 = vld [vmem:[#allocation2 + $0x80] sm:$0xff]
      %v927 = vld [vmem:[#allocation2 + $0x88] sm:$0xff]
      %s928 = scalar_lea.vmem %s1, 16
      %v929 = vld [vmem:[%s928] sm:$0xff]
      %s930 = scalar_lea.vmem %s2, 16
      %v931 = vld [vmem:[%s930] sm:$0xff]
      %933 = vset.pattern.permute.xlu0 0
      %934 = vperm.xlu0 %933, %v931
      %v935 = vpop.permute.xlu0 %934
      %v938 = vsel %vm363, %v929, 0
      %940 = vmatprep.subr.mxu0 %v911
      %941 = vmatpush1.msra.mxu0 %v910
      %942 = vmatprep.subr.mxu0 %v913
      %943 = vmatpush1.msra.mxu0 %v912
      %944 = vmatprep.subr.mxu0 %v915
      %945 = vmatpush1.msra.mxu0 %v914
      %946 = vmatprep.subr.mxu0 %v917
      %947 = vmatpush1.msra.mxu0 %v916
      %948 = vmatprep.subr.mxu0 %v919
      %949 = vmatpush1.msra.mxu0 %v918
      %950 = vmatprep.subr.mxu0 %v921
      %951 = vmatpush1.msra.mxu0 %v920
      %952 = vmatprep.subr.mxu0 %v923
      %953 = vmatpush1.msra.mxu0 %v922
      %954 = vmatprep.subr.mxu0 %v925
      %955 = vmatpush1.msra.mxu0 %v924
      %956 = vmatprep.subr.mxu0 %v927
      %957 = vmatpush1.msra.mxu0 %v926
      %958 = vmatprep.subr.mxu0 0.0
      %959 = vmatpush1.msra.mxu0 0.0
      %960 = vmatprep.subr.mxu0 0.0
      %961 = vmatpush1.msra.mxu0 0.0
      %962 = vmatprep.subr.mxu0 0.0
      %963 = vmatpush1.msra.mxu0 0.0
      %964 = vmatprep.subr.mxu0 0.0
      %965 = vmatpush1.msra.mxu0 0.0
      %966 = vmatprep.subr.mxu0 0.0
      %967 = vmatpush1.msra.mxu0 0.0
      %968 = vmatprep.subr.mxu0 0.0
      %969 = vmatpush1.msra.mxu0 0.0
      %970 = vmatprep.subr.mxu0 0.0
      %971 = vmatpush1.msra.mxu0 0.0
      %972 = vmatprep.subr.mxu0 0.0
      %973 = vmatpush1.msra.mxu0 0.0
      %974 = vmatprep.subr.mxu0 0.0
      %975 = vmatpush1.msra.mxu0 0.0
      %976 = vmatprep.subr.mxu0 0.0
      %977 = vmatpush1.msra.mxu0 0.0
      %978 = vmatprep.subr.mxu0 0.0
      %979 = vmatpush1.msra.mxu0 0.0
      %980 = vmatprep.subr.mxu0 0.0
      %981 = vmatpush1.msra.mxu0 0.0
      %982 = vmatprep.subr.mxu0 0.0
      %983 = vmatpush1.msra.mxu0 0.0
      %984 = vmatprep.subr.mxu0 0.0
      %985 = vmatpush1.msra.mxu0 0.0
      %986 = vmatprep.subr.mxu0 0.0
      %987 = vmatpush1.msra.mxu0 0.0
      %988 = vmatprep.subr.mxu0 0.0
      %989 = vmatpush1.msra.mxu0 0.0
      %990 = vmatprep.subr.mxu0 0.0
      %991 = vmatpush1.msra.mxu0 0.0
      %992 = vmatprep.subr.mxu0 0.0
      %993 = vmatpush1.msra.mxu0 0.0
      %994 = vmatprep.subr.mxu0 0.0
      %995 = vmatpush1.msra.mxu0 0.0
      %996 = vmatprep.subr.mxu0 0.0
      %997 = vmatpush1.msra.mxu0 0.0
      %998 = vmatprep.subr.mxu0 0.0
      %999 = vmatpush1.msra.mxu0 0.0
      %1000 = vmatprep.subr.mxu0 0.0
      %1001 = vmatpush1.msra.mxu0 0.0
      %1002 = vmatprep.subr.mxu0 0.0
      %1003 = vmatpush1.msra.mxu0 0.0
      %1004 = vmatprep.mubr.f32.mxu0 0.0
      %1005 = vmatmul.mubr.f32.gmra.mrb[0].mxu0 %v938
      %v1006 = vpop.f32.mrb[0].mxu0
      %v1007 = vadd.f32 %v935, %v1006
      %v1008 = vpop.f32.mrb[0].mxu0
      %v1009 = vadd.f32 %v935, %v1008
      %1010 = vdwg.mxu0
      %1011 = vrot.lane.b32.xlu0 %v826, 17
      %v1012 = vpop.permute.xlu0 %1011
      %1013 = vrot.lane.b32.xlu0 %v827, 17
      %v1014 = vpop.permute.xlu0 %1013
      %v1015 = vsel %vm252, %v1012, %v1014
      %v1016 = vsel %vm252, %v1014, %v1012
      %v1017 = vsel %vm236, %v1016, 0.0
      %v1018 = vsel %vm237, %v1015, 0.0
      %1019 = vst [vmem:[#allocation2] sm:$0xff] %v1017
      %1020 = vst [vmem:[#allocation2 + $0x8] sm:$0xff] %v1018
      %1021 = vrot.lane.b32.xlu0 %v826, 16
      %v1022 = vpop.permute.xlu0 %1021
      %1023 = vrot.lane.b32.xlu0 %v827, 16
      %v1024 = vpop.permute.xlu0 %1023
      %v1025 = vsel %vm263, %v1022, %v1024
      %v1026 = vsel %vm263, %v1024, %v1022
      %v1027 = vsel %vm232, %v1026, 0.0
      %v1028 = vsel %vm233, %v1025, 0.0
      %1029 = vst [vmem:[#allocation2 + $0x10] sm:$0xff] %v1027
      %1030 = vst [vmem:[#allocation2 + $0x18] sm:$0xff] %v1028
      %1031 = vrot.lane.b32.xlu0 %v826, 15
      %v1032 = vpop.permute.xlu0 %1031
      %1033 = vrot.lane.b32.xlu0 %v827, 15
      %v1034 = vpop.permute.xlu0 %1033
      %v1035 = vsel %vm274, %v1032, %v1034
      %v1036 = vsel %vm274, %v1034, %v1032
      %v1037 = vsel %vm240, %v1036, 0.0
      %v1038 = vsel %vm241, %v1035, 0.0
      %1039 = vst [vmem:[#allocation2 + $0x20] sm:$0xff] %v1037
      %1040 = vst [vmem:[#allocation2 + $0x28] sm:$0xff] %v1038
      %1041 = vrot.lane.b32.xlu0 %v826, 1
      %v1042 = vpop.permute.xlu0 %1041
      %1043 = vrot.lane.b32.xlu0 %v827, 1
      %v1044 = vpop.permute.xlu0 %1043
      %v1045 = vsel %vm285, %v1042, %v1044
      %v1046 = vsel %vm285, %v1044, %v1042
      %v1047 = vsel %vm234, %v1046, 0.0
      %v1048 = vsel %vm235, %v1045, 0.0
      %1049 = vst [vmem:[#allocation2 + $0x30] sm:$0xff] %v1047
      %1050 = vst [vmem:[#allocation2 + $0x38] sm:$0xff] %v1048
      %1051 = vst [vmem:[#allocation2 + $0x40] sm:$0xff] %v826
      %1052 = vst [vmem:[#allocation2 + $0x48] sm:$0xff] %v827
      %1053 = vrot.lane.b32.xlu0 %v826, 127
      %v1054 = vpop.permute.xlu0 %1053
      %1055 = vrot.lane.b32.xlu0 %v827, 127
      %v1056 = vpop.permute.xlu0 %1055
      %v1057 = vsel %vm298, %v1054, %v1056
      %v1058 = vsel %vm298, %v1056, %v1054
      %v1059 = vsel %vm238, %v1057, 0.0
      %v1060 = vsel %vm239, %v1058, 0.0
      %1061 = vst [vmem:[#allocation2 + $0x50] sm:$0xff] %v1059
      %1062 = vst [vmem:[#allocation2 + $0x58] sm:$0xff] %v1060
      %1063 = vrot.lane.b32.xlu0 %v826, 113
      %v1064 = vpop.permute.xlu0 %1063
      %1065 = vrot.lane.b32.xlu0 %v827, 113
      %v1066 = vpop.permute.xlu0 %1065
      %v1067 = vsel %vm309, %v1064, %v1066
      %v1068 = vsel %vm309, %v1066, %v1064
      %v1069 = vsel %vm244, %v1067, 0.0
      %v1070 = vsel %vm245, %v1068, 0.0
      %1071 = vst [vmem:[#allocation2 + $0x60] sm:$0xff] %v1069
      %1072 = vst [vmem:[#allocation2 + $0x68] sm:$0xff] %v1070
      %1073 = vrot.lane.b32.xlu0 %v826, 112
      %v1074 = vpop.permute.xlu0 %1073
      %1075 = vrot.lane.b32.xlu0 %v827, 112
      %v1076 = vpop.permute.xlu0 %1075
      %v1077 = vsel %vm320, %v1074, %v1076
      %v1078 = vsel %vm320, %v1076, %v1074
      %v1079 = vsel %vm242, %v1077, 0.0
      %v1080 = vsel %vm243, %v1078, 0.0
      %1081 = vst [vmem:[#allocation2 + $0x70] sm:$0xff] %v1079
      %1082 = vst [vmem:[#allocation2 + $0x78] sm:$0xff] %v1080
      %1083 = vrot.lane.b32.xlu0 %v826, 111
      %v1084 = vpop.permute.xlu0 %1083
      %1085 = vrot.lane.b32.xlu0 %v827, 111
      %v1086 = vpop.permute.xlu0 %1085
      %v1087 = vsel %vm331, %v1084, %v1086
      %v1088 = vsel %vm331, %v1086, %v1084
      %v1089 = vsel %vm246, %v1087, 0.0
      %v1090 = vsel %vm247, %v1088, 0.0
      %1091 = vst [vmem:[#allocation2 + $0x80] sm:$0xff] %v1089
      %1092 = vst [vmem:[#allocation2 + $0x88] sm:$0xff] %v1090
      %v1093 = vld [vmem:[#allocation2] sm:$0xff]
      %v1094 = vld [vmem:[#allocation2 + $0x8] sm:$0xff]
      %v1095 = vld [vmem:[#allocation2 + $0x10] sm:$0xff]
      %v1096 = vld [vmem:[#allocation2 + $0x18] sm:$0xff]
      %v1097 = vld [vmem:[#allocation2 + $0x20] sm:$0xff]
      %v1098 = vld [vmem:[#allocation2 + $0x28] sm:$0xff]
      %v1099 = vld [vmem:[#allocation2 + $0x30] sm:$0xff]
      %v1100 = vld [vmem:[#allocation2 + $0x38] sm:$0xff]
      %v1101 = vld [vmem:[#allocation2 + $0x40] sm:$0xff]
      %v1102 = vld [vmem:[#allocation2 + $0x48] sm:$0xff]
      %v1103 = vld [vmem:[#allocation2 + $0x50] sm:$0xff]
      %v1104 = vld [vmem:[#allocation2 + $0x58] sm:$0xff]
      %v1105 = vld [vmem:[#allocation2 + $0x60] sm:$0xff]
      %v1106 = vld [vmem:[#allocation2 + $0x68] sm:$0xff]
      %v1107 = vld [vmem:[#allocation2 + $0x70] sm:$0xff]
      %v1108 = vld [vmem:[#allocation2 + $0x78] sm:$0xff]
      %v1109 = vld [vmem:[#allocation2 + $0x80] sm:$0xff]
      %v1110 = vld [vmem:[#allocation2 + $0x88] sm:$0xff]
      %s1111 = scalar_lea.vmem %s1, 24
      %v1112 = vld [vmem:[%s1111] sm:$0xff]
      %s1113 = scalar_lea.vmem %s2, 24
      %v1114 = vld [vmem:[%s1113] sm:$0xff]
      %1116 = vset.pattern.permute.xlu0 0
      %1117 = vperm.xlu0 %1116, %v1114
      %v1118 = vpop.permute.xlu0 %1117
      %v1121 = vsel %vm363, %v1112, 0
      %1123 = vmatprep.subr.mxu0 %v1094
      %1124 = vmatpush1.msra.mxu0 %v1093
      %1125 = vmatprep.subr.mxu0 %v1096
      %1126 = vmatpush1.msra.mxu0 %v1095
      %1127 = vmatprep.subr.mxu0 %v1098
      %1128 = vmatpush1.msra.mxu0 %v1097
      %1129 = vmatprep.subr.mxu0 %v1100
      %1130 = vmatpush1.msra.mxu0 %v1099
      %1131 = vmatprep.subr.mxu0 %v1102
      %1132 = vmatpush1.msra.mxu0 %v1101
      %1133 = vmatprep.subr.mxu0 %v1104
      %1134 = vmatpush1.msra.mxu0 %v1103
      %1135 = vmatprep.subr.mxu0 %v1106
      %1136 = vmatpush1.msra.mxu0 %v1105
      %1137 = vmatprep.subr.mxu0 %v1108
      %1138 = vmatpush1.msra.mxu0 %v1107
      %1139 = vmatprep.subr.mxu0 %v1110
      %1140 = vmatpush1.msra.mxu0 %v1109
      %1141 = vmatprep.subr.mxu0 0.0
      %1142 = vmatpush1.msra.mxu0 0.0
      %1143 = vmatprep.subr.mxu0 0.0
      %1144 = vmatpush1.msra.mxu0 0.0
      %1145 = vmatprep.subr.mxu0 0.0
      %1146 = vmatpush1.msra.mxu0 0.0
      %1147 = vmatprep.subr.mxu0 0.0
      %1148 = vmatpush1.msra.mxu0 0.0
      %1149 = vmatprep.subr.mxu0 0.0
      %1150 = vmatpush1.msra.mxu0 0.0
      %1151 = vmatprep.subr.mxu0 0.0
      %1152 = vmatpush1.msra.mxu0 0.0
      %1153 = vmatprep.subr.mxu0 0.0
      %1154 = vmatpush1.msra.mxu0 0.0
      %1155 = vmatprep.subr.mxu0 0.0
      %1156 = vmatpush1.msra.mxu0 0.0
      %1157 = vmatprep.subr.mxu0 0.0
      %1158 = vmatpush1.msra.mxu0 0.0
      %1159 = vmatprep.subr.mxu0 0.0
      %1160 = vmatpush1.msra.mxu0 0.0
      %1161 = vmatprep.subr.mxu0 0.0
      %1162 = vmatpush1.msra.mxu0 0.0
      %1163 = vmatprep.subr.mxu0 0.0
      %1164 = vmatpush1.msra.mxu0 0.0
      %1165 = vmatprep.subr.mxu0 0.0
      %1166 = vmatpush1.msra.mxu0 0.0
      %1167 = vmatprep.subr.mxu0 0.0
      %1168 = vmatpush1.msra.mxu0 0.0
      %1169 = vmatprep.subr.mxu0 0.0
      %1170 = vmatpush1.msra.mxu0 0.0
      %1171 = vmatprep.subr.mxu0 0.0
      %1172 = vmatpush1.msra.mxu0 0.0
      %1173 = vmatprep.subr.mxu0 0.0
      %1174 = vmatpush1.msra.mxu0 0.0
      %1175 = vmatprep.subr.mxu0 0.0
      %1176 = vmatpush1.msra.mxu0 0.0
      %1177 = vmatprep.subr.mxu0 0.0
      %1178 = vmatpush1.msra.mxu0 0.0
      %1179 = vmatprep.subr.mxu0 0.0
      %1180 = vmatpush1.msra.mxu0 0.0
      %1181 = vmatprep.subr.mxu0 0.0
      %1182 = vmatpush1.msra.mxu0 0.0
      %1183 = vmatprep.subr.mxu0 0.0
      %1184 = vmatpush1.msra.mxu0 0.0
      %1185 = vmatprep.subr.mxu0 0.0
      %1186 = vmatpush1.msra.mxu0 0.0
      %1187 = vmatprep.mubr.f32.mxu0 0.0
      %1188 = vmatmul.mubr.f32.gmra.mrb[0].mxu0 %v1121
      %v1189 = vpop.f32.mrb[0].mxu0
      %v1190 = vadd.f32 %v1118, %v1189
      %v1191 = vpop.f32.mrb[0].mxu0
      %v1192 = vadd.f32 %v1118, %v1191
      %1193 = vdwg.mxu0
      %v1194 = vsub.f32 0.0, %v1007
      %v1195 = vsub.f32 0.0, %v1009
      %v1196 = vmul.f32 %v1194, 1.442695
      %v1197 = vpow.pop %v1196
      %v1198 = vmul.f32 %v1195, 1.442695
      %v1199 = vpow.pop %v1198
      %v1200 = vadd.f32 %v1197, 1.0
      %v1201 = vadd.f32 %v1199, 1.0
      %v1202 = vrcp.pop %v1200
      %v1203 = vrcp.pop %v1201
      %v1204 = vmul.f32 %v225, %v1202
      %v1205 = vmul.f32 %v226, %v1203
      %v1206 = vadd.f32 %v1204, %v1190
      %v1207 = vadd.f32 %v1205, %v1192
      %1208 = vst [vmem:[%s224] sm:$0xff] %v1206
      %1209 = vst [vmem:[%s224 + $0x8] sm:$0xff] %v1207
      %p1210 = scmp.lt.s32.totalorder %s16, 1
      %s1211 = scalar_select %p1210, %s16, 1
      %s1212 = smul.addr %s1211, 2
      %s1213 = smul.addr %s1212, 8
      %s1214 = scalar_lea.vmem %s5, %s1213
      // Predicated region
      $region41: #{saab_pallas.1} parent=39 // pred_check
        %p1215 = pneg %p144
      $region42: #{saab_pallas.1} parent=39 // pred_check_branch
        %1217 = sbr.rel (%p1215) target = $region44
      $region43: #{saab_pallas.1} parent=39 // pred_region
        _
      $region44: #{saab_pallas.1} parent=39 // pred_fallthru
        _
    $region40: #{saab_pallas.1} parent=5 // pred_fallthru
      _
    %p1218 = scmp.le.s32.totalorder 2, %s11
    // Predicated region
    $region45: #{saab_pallas.1} parent=5 // pred_check
      %p1219 = pneg %p1218
    $region46: #{saab_pallas.1} parent=5 // pred_check_branch
      %1221 = sbr.rel (%p1219) target = $region48
    $region47: #{saab_pallas.1} parent=5 // pred_region
      %s1222 = ssub.s32 %s11, 2
      // Predicated region
      $region49: #{saab_pallas.1} parent=47 // pred_check
        %p1223 = pneg %p150
      $region50: #{saab_pallas.1} parent=47 // pred_check_branch
        %1225 = sbr.rel (%p1223) target = $region52
      $region51: #{saab_pallas.1} parent=47 // pred_region
        %p1226 = scmp.lt.s32.totalorder %s17, 1
        %s1227 = scalar_select %p1226, %s17, 1
        %s1228 = smul.addr %s1227, 2
        %s1229 = smul.addr %s1228, 8
        %s1230 = scalar_lea.vmem %s5, %s1229
      $region52: #{saab_pallas.1} parent=47 // pred_fallthru
        _
    $region48: #{saab_pallas.1} parent=5 // pred_fallthru
      _
  $region6: #{saab_pallas.1} parent=0 // loop_footer
    %s15 = sadd.s32 1, %s11
  $region7: #{saab_pallas.1} parent=0 // loop_footer_branch
    %10 = sbr.rel target = $region3
  $region8: #{saab_pallas.1} parent=0 // loop_exit
    _

</llo_original>
